<compile_context>
chip_gen: v7x
topology: tpu7x:2x2x1
jax: 0.10.0
libtpu: 0.0.40
codegen_flags: <defaults>
</compile_context>

<pallas_src>
import functools

import jax
import jax.numpy as jnp
from jax.experimental import pallas as pl
from jax.experimental.pallas import tpu as pltpu

EPS = 1e-5


# --------------------------------------------------------------------------- #
# In-kernel helpers
# --------------------------------------------------------------------------- #
def _lane_masks(length):
    """Boundary masks for the length (lane) axis, computed once per body."""
    lane = jax.lax.broadcasted_iota(jnp.int32, (1, length), 1)
    return lane == 0, lane == length - 1


def _conv3(w_ref, v, first, last, fused):
    """kernel_size=3, padding=1 Conv1d on one (C, L) slab (bias dropped).

    fused=True : w_ref is (Cout, 3*Cin) -> single K-stacked MXU pass (small Cin).
    fused=False: w_ref is (3, Cout, Cin) -> three matmuls accumulated in f32
                 (large or unaligned Cin; avoids a per-step (3*Cin, L) copy).
    """
    length = v.shape[1]
    vm1 = jnp.where(first, 0.0, pltpu.roll(v, shift=1, axis=1))          # v[l-1]
    vp1 = jnp.where(last, 0.0, pltpu.roll(v, shift=length - 1, axis=1))  # v[l+1]
    if fused:
        stacked = jnp.concatenate([vm1, v, vp1], axis=0)                 # (3C, L)
        return jnp.dot(w_ref[...], stacked, preferred_element_type=jnp.float32)
    y = jnp.dot(w_ref[0], vm1, preferred_element_type=jnp.float32)
    y += jnp.dot(w_ref[1], v, preferred_element_type=jnp.float32)
    y += jnp.dot(w_ref[2], vp1, preferred_element_type=jnp.float32)
    return y


# --------------------------------------------------------------------------- #
# Kernels (b_tile samples per grid step; batch-tile axis is "parallel")
# --------------------------------------------------------------------------- #
def _stats_kernel(x_ref, w1_ref, wsc_ref, stats_ref, *xcd_out,
                  compute_dtype, fuse1, b_tile):
    """Pass 1: conv1(x) & shortcut conv(x) -> per-channel sum / sum-of-squares.

    stats_ref block is (Cout, 4): [sum1 | sumsq1 | sum_sc | sumsq_sc].
    Optionally also writes x cast to compute_dtype (xcd_out[0])."""
    length = x_ref.shape[-1]
    cout = stats_ref.shape[0]
    first, last = _lane_masks(length)

    s1 = jnp.zeros((cout, 1), jnp.float32)
    q1 = jnp.zeros((cout, 1), jnp.float32)
    sr = jnp.zeros((cout, 1), jnp.float32)
    qr = jnp.zeros((cout, 1), jnp.float32)
    for b in range(b_tile):                       # static unroll over batch tile
        xb = x_ref[b].astype(compute_dtype)
        if xcd_out:
            xcd_out[0][b] = xb
        h1 = _conv3(w1_ref, xb, first, last, fuse1)                      # f32
        r = jnp.dot(wsc_ref[...], xb, preferred_element_type=jnp.float32)
        s1 += jnp.sum(h1, axis=1, keepdims=True)
        q1 += jnp.sum(h1 * h1, axis=1, keepdims=True)
        sr += jnp.sum(r, axis=1, keepdims=True)
        qr += jnp.sum(r * r, axis=1, keepdims=True)

    stats_ref[:, 0:1] = s1
    stats_ref[:, 1:2] = q1
    stats_ref[:, 2:3] = sr
    stats_ref[:, 3:4] = qr


def _mid_kernel(x_ref, w1_ref, w2_ref, sc1_ref, sh1_ref, h2_ref, stats_ref,
                *, compute_dtype, fuse1, fuse2, b_tile):
    """Pass 2: conv1 -> folded BN1 -> ReLU -> conv2; emit h2 and BN2 stats."""
    length = x_ref.shape[-1]
    cout = stats_ref.shape[0]
    first, last = _lane_masks(length)

    s2 = jnp.zeros((cout, 1), jnp.float32)
    q2 = jnp.zeros((cout, 1), jnp.float32)
    for b in range(b_tile):
        xb = x_ref[b].astype(compute_dtype)
        h1 = _conv3(w1_ref, xb, first, last, fuse1)
        h1 = jnp.maximum(h1 * sc1_ref[...] + sh1_ref[...], 0.0)          # BN1+ReLU
        h2 = _conv3(w2_ref, h1.astype(compute_dtype), first, last, fuse2)
        h2_ref[b] = h2.astype(h2_ref.dtype)       # bf16 store; stats use f32 h2
        s2 += jnp.sum(h2, axis=1, keepdims=True)
        q2 += jnp.sum(h2 * h2, axis=1, keepdims=True)

    stats_ref[:, 0:1] = s2
    stats_ref[:, 1:2] = q2


def _final_kernel(x_ref, h2_ref, wsc_ref, scs_ref, shs_ref, sc2_ref, sh2_ref,
                  o_ref, *, compute_dtype, b_tile):
    """Pass 3: folded BN2(h2) + folded BN(shortcut conv(x)), add, ReLU."""
    for b in range(b_tile):
        xb = x_ref[b].astype(compute_dtype)
        r = jnp.dot(wsc_ref[...], xb, preferred_element_type=jnp.float32)
        r = r * scs_ref[...] + shs_ref[...]                              # shortcut BN
        h2 = h2_ref[b].astype(jnp.float32)
        o_ref[b] = jnp.maximum(h2 * sc2_ref[...] + sh2_ref[...] + r,
                               0.0).astype(o_ref.dtype)


# --------------------------------------------------------------------------- #
# Wrapper
# --------------------------------------------------------------------------- #
def _fold_bn(s, q, gamma, beta, count):
    """Fold training-mode BN into per-channel scale/shift from sum & sum-sq."""
    # TODO(synk): one-pass E[x^2]-E[x]^2 can lose precision for very large N*L
    # (catastrophic cancellation); use a shifted/two-pass reduction if needed.
    mean = s / count
    var = jnp.maximum(q / count - mean * mean, 0.0)
    scale = gamma * jax.lax.rsqrt(var + EPS)
    shift = beta - scale * mean
    return (scale.reshape(-1, 1).astype(jnp.float32),
            shift.reshape(-1, 1).astype(jnp.float32))


def _pack_conv_w(w, fused, dtype):
    # torch Conv1d weight (Cout, Cin, 3); tap k=0 -> x[l-1], 1 -> x[l], 2 -> x[l+1]
    if fused:
        # (Cout, 3*Cin), tap-major, matches [v[l-1]; v; v[l+1]] channel stacking
        return jnp.transpose(w, (0, 2, 1)).reshape(w.shape[0], -1).astype(dtype)
    return jnp.transpose(w, (2, 0, 1)).astype(dtype)  # (3, Cout, Cin)


def residual_block_pallas(x, params, *, compute_dtype=jnp.float32,
                          h2_dtype=jnp.bfloat16):
    """x: (N, Cin, L) -> (N, Cout, L).  stride=1 path only (as in the demo)."""
    # TODO(synk): stride != 1 (downsampling conv) and the identity-shortcut
    # (in_channels == out_channels) configuration are not implemented.
    n, cin, length = x.shape
    cout = params["w1"].shape[0]
    count = float(n * length)

    cd = jnp.dtype(compute_dtype)
    h2d = jnp.dtype(h2_dtype)
    sub = 32 // cd.itemsize                     # sublane packing: f32->8, bf16->16
    fuse1 = (cin % sub == 0) and (cin < 128)    # K-stack taps only for small Cin
    fuse2 = (cout % sub == 0) and (cout < 128)

    w1p = _pack_conv_w(params["w1"], fuse1, compute_dtype)
    w2p = _pack_conv_w(params["w2"], fuse2, compute_dtype)
    wsc = params["ws"][:, :, 0].astype(compute_dtype)                    # (Cout,Cin)

    # ---- generation-aware VMEM budget / batch-tile sizing -------------------
    try:
        vmem_cap = int(pltpu.get_tpu_info().vmem_capacity_bytes)
    except Exception:                                  # non-TPU / older runtime
        vmem_cap = 64 * 1024 * 1024
    vmem_limit = min(vmem_cap * 3 // 4, 96 * 1024 * 1024)  # ~48MiB v7x, 96MiB v5e/v6e

    x_bytes = jnp.dtype(x.dtype).itemsize
    emit_xcd = cd.itemsize < x_bytes            # pass1 also writes compute-dtype x
    per_sample_bytes = (
        2 * cin * length * x_bytes                           # x block (dbl-buffered)
        + (2 * cin * length * cd.itemsize if emit_xcd else 0)
        + 2 * cout * length * h2d.itemsize                   # h2 block
        + 2 * cout * length * x_bytes                        # output block
        + (3 * cin + 4 * cout) * length * 4)                 # in-kernel temps
    weight_bytes = int((w1p.size + w2p.size + wsc.size) * cd.itemsize)
    budget = max(vmem_limit // 3 - weight_bytes, 2 * 1024 * 1024)
    b_tile = 1
    for cand in range(1, min(n, 8) + 1):        # cap static unroll at 8 samples
        if n % cand == 0 and cand * per_sample_bytes <= budget:
            b_tile = cand
    n_steps = n // b_tile

    cparams = pltpu.CompilerParams(
        dimension_semantics=("parallel",),      # batch tiles shard across TCs (v7x)
        vmem_limit_bytes=int(vmem_limit))

    x_block = pl.BlockSpec((b_tile, cin, length), lambda i: (i, 0, 0))
    y_block = pl.BlockSpec((b_tile, cout, length), lambda i: (i, 0, 0))

    def whole(arr):
        nd = arr.ndim
        return pl.BlockSpec(arr.shape, lambda i, _nd=nd: (0,) * _nd)

    def stat_spec(ncols):
        return pl.BlockSpec((None, cout, ncols), lambda i: (i, 0, 0))

    # ---- pass 1: conv1 / shortcut-conv statistics (+ optional x cast) -------
    out_shape1 = [jax.ShapeDtypeStruct((n_steps, cout, 4), jnp.float32)]
    out_specs1 = [stat_spec(4)]
    if emit_xcd:
        out_shape1.append(jax.ShapeDtypeStruct((n, cin, length), compute_dtype))
        out_specs1.append(x_block)

    flops1 = 2 * n * length * cout * (3 * cin + cin)
    bytes1 = (n * cin * length * (x_bytes + (cd.itemsize if emit_xcd else 0))
              + weight_bytes + n_steps * cout * 4 * 4)
    res1 = pl.pallas_call(
        functools.partial(_stats_kernel, compute_dtype=compute_dtype,
                          fuse1=fuse1, b_tile=b_tile),
        grid=(n_steps,),
        in_specs=[x_block, whole(w1p), whole(wsc)],
        out_specs=tuple(out_specs1),
        out_shape=tuple(out_shape1),
        compiler_params=cparams,
        cost_estimate=pl.CostEstimate(flops=int(flops1), transcendentals=0,
                                      bytes_accessed=int(bytes1)),
    )(x, w1p, wsc)
    if emit_xcd:
        stats1, x_cd = res1
    else:
        (stats1,) = res1
        x_cd = x

    s1 = jnp.sum(stats1[:, :, 0], axis=0)
    q1 = jnp.sum(stats1[:, :, 1], axis=0)
    sr = jnp.sum(stats1[:, :, 2], axis=0)
    qr = jnp.sum(stats1[:, :, 3], axis=0)
    sc1, sh1 = _fold_bn(s1, q1, params["g1"], params["be1"], count)
    scs, shs = _fold_bn(sr, qr, params["gs"], params["bes"], count)

    # ---- pass 2: conv1 -> BN1 -> ReLU -> conv2, plus BN2 statistics ---------
    flops2 = 2 * n * length * cout * 3 * (cin + cout)
    bytes2 = (n * cin * length * jnp.dtype(x_cd.dtype).itemsize
              + n * cout * length * h2d.itemsize
              + weight_bytes + n_steps * cout * 2 * 4)
    h2, stats2 = pl.pallas_call(
        functools.partial(_mid_kernel, compute_dtype=compute_dtype,
                          fuse1=fuse1, fuse2=fuse2, b_tile=b_tile),
        grid=(n_steps,),
        in_specs=[x_block, whole(w1p), whole(w2p), whole(sc1), whole(sh1)],
        out_specs=(y_block, stat_spec(2)),
        out_shape=(jax.ShapeDtypeStruct((n, cout, length), h2_dtype),
                   jax.ShapeDtypeStruct((n_steps, cout, 2), jnp.float32)),
        compiler_params=cparams,
        cost_estimate=pl.CostEstimate(flops=int(flops2), transcendentals=0,
                                      bytes_accessed=int(bytes2)),
    )(x_cd, w1p, w2p, sc1, sh1)

    s2 = jnp.sum(stats2[:, :, 0], axis=0)
    q2 = jnp.sum(stats2[:, :, 1], axis=0)
    sc2, sh2 = _fold_bn(s2, q2, params["g2"], params["be2"], count)

    # ---- pass 3: BN2(h2) + BN_sc(shortcut), ReLU ----------------------------
    flops3 = 2 * n * length * cout * cin
    bytes3 = (n * cin * length * jnp.dtype(x_cd.dtype).itemsize
              + n * cout * length * (h2d.itemsize + x_bytes)
              + wsc.size * cd.itemsize)
    out = pl.pallas_call(
        functools.partial(_final_kernel, compute_dtype=compute_dtype,
                          b_tile=b_tile),
        grid=(n_steps,),
        in_specs=[x_block, y_block, whole(wsc),
                  whole(scs), whole(shs), whole(sc2), whole(sh2)],
        out_specs=y_block,
        out_shape=jax.ShapeDtypeStruct((n, cout, length), x.dtype),
        compiler_params=cparams,
        cost_estimate=pl.CostEstimate(flops=int(flops3), transcendentals=0,
                                      bytes_accessed=int(bytes3)),
    )(x_cd, h2, wsc, scs, shs, sc2, sh2)

    return out


# --------------------------------------------------------------------------- #
# Pure-JAX reference matching the PyTorch forward (training-mode BN)
# --------------------------------------------------------------------------- #
def residual_block_ref(x, params):
    def conv1d(v, w, b, pad):
        y = jax.lax.conv_general_dilated(
            v, w, window_strides=(1,), padding=[(pad, pad)],
            dimension_numbers=("NCH", "OIH", "NCH"))
        return y + b[None, :, None]

    def bn(v, g, be):
        mean = v.mean(axis=(0, 2), keepdims=True)
        var = ((v - mean) ** 2).mean(axis=(0, 2), keepdims=True)
        return (g[None, :, None] * (v - mean) / jnp.sqrt(var + EPS)
                + be[None, :, None])

    res = bn(conv1d(x, params["ws"], params["bs"], 0), params["gs"], params["bes"])
    h = conv1d(x, params["w1"], params["b1"], 1)
    h = jax.nn.relu(bn(h, params["g1"], params["be1"]))
    h = conv1d(h, params["w2"], params["b2"], 1)
    h = bn(h, params["g2"], params["be2"])
    return jax.nn.relu(h + res)


def init_params(key, cin, cout):
    ks = jax.random.split(key, 6)
    return {
        "w1": 0.2 * jax.random.normal(ks[0], (cout, cin, 3), jnp.float32),
        "b1": 0.1 * jax.random.normal(ks[1], (cout,), jnp.float32),
        "g1": jnp.ones((cout,), jnp.float32),
        "be1": jnp.zeros((cout,), jnp.float32),
        "w2": 0.2 * jax.random.normal(ks[2], (cout, cout, 3), jnp.float32),
        "b2": 0.1 * jax.random.normal(ks[3], (cout,), jnp.float32),
        "g2": jnp.ones((cout,), jnp.float32),
        "be2": jnp.zeros((cout,), jnp.float32),
        # shortcut path (in_channels != out_channels)
        "ws": 0.2 * jax.random.normal(ks[4], (cout, cin, 1), jnp.float32),
        "bs": 0.1 * jax.random.normal(ks[5], (cout,), jnp.float32),
        "gs": jnp.ones((cout,), jnp.float32),
        "bes": jnp.zeros((cout,), jnp.float32),
    }


if __name__ == "__main__":
    # ResidualBlock(in_channels=4, out_channels=8, stride=1) on x: (N=2, C=4, L=16)
    key = jax.random.PRNGKey(0)
    kx, kp = jax.random.split(key)
    N, CIN, COUT, L = 2, 4, 8, 16

    x = jax.random.normal(kx, (N, CIN, L), jnp.float32)
    params = init_params(kp, CIN, COUT)
    ref = jax.block_until_ready(residual_block_ref(x, params))

    # Default path: f32 compute, bf16 h2 intermediate (loosened tolerance
    # accounts for the bf16 rounding of the h2 intermediate only).
    fwd = jax.jit(residual_block_pallas)
    out = jax.block_until_ready(fwd(x, params))
    assert out.shape == (N, COUT, L), out.shape
    err = float(jnp.max(jnp.abs(out - ref)))
    assert jnp.allclose(out, ref, atol=3e-2, rtol=3e-2), err

    # Production path: bf16 MXU operands + bf16 x copy emitted from pass 1.
    fwd_bf16 = jax.jit(functools.partial(residual_block_pallas,
                                         compute_dtype=jnp.bfloat16))
    out_bf = jax.block_until_ready(fwd_bf16(x, params))
    assert out_bf.shape == (N, COUT, L), out_bf.shape
    assert bool(jnp.all(jnp.isfinite(out_bf)))
    assert jnp.allclose(out_bf, ref, atol=0.25, rtol=0.25)

    print("KERNEL_OK")
</pallas_src>

<mosaic_0001>
module attributes {stable_mosaic.version = 11 : i64} {
  func.func @_stats_kernel(%arg0: i32, %arg1: memref<2x4x16xf32, #tpu.memory_space<vmem>>, %arg2: memref<3x8x4xf32, #tpu.memory_space<vmem>>, %arg3: memref<8x4xf32, #tpu.memory_space<vmem>>, %arg4: memref<1x8x4xf32, #tpu.memory_space<vmem>>) attributes {dimension_semantics = [#tpu.dimension_semantics<parallel>], iteration_bounds = array<i64: 1>, scalar_prefetch = 0 : i64, scratch_operands = 0 : i64, tpu.core_type = #tpu.core_type<tc>, window_params = [{transform_indices = @transform_0, window_bounds = array<i64: 2, 4, 16>}, {pipeline_mode = #tpu.pipeline_mode<synchronous>, transform_indices = @transform_1, window_bounds = array<i64: 3, 8, 4>}, {pipeline_mode = #tpu.pipeline_mode<synchronous>, transform_indices = @transform_2, window_bounds = array<i64: 8, 4>}, {transform_indices = @transform_3, window_bounds = array<i64: 1, 8, 4>}]} {
    %0 = tpu.iota {dimensions = array<i32: 1>} : vector<1x16xi32>
    %c0_i32 = arith.constant 0 : i32
    %1 = vector.broadcast %c0_i32 : i32 to vector<1x16xi32>
    %2 = arith.cmpi eq, %0, %1 : vector<1x16xi32>
    %c15_i32 = arith.constant 15 : i32
    %3 = vector.broadcast %c15_i32 : i32 to vector<1x16xi32>
    %4 = arith.cmpi eq, %0, %3 : vector<1x16xi32>
    %cst = arith.constant 0.000000e+00 : f32
    %5 = vector.broadcast %cst : f32 to vector<8x1xf32>
    %cst_0 = arith.constant 0.000000e+00 : f32
    %6 = vector.broadcast %cst_0 : f32 to vector<8x1xf32>
    %cst_1 = arith.constant 0.000000e+00 : f32
    %7 = vector.broadcast %cst_1 : f32 to vector<8x1xf32>
    %cst_2 = arith.constant 0.000000e+00 : f32
    %8 = vector.broadcast %cst_2 : f32 to vector<8x1xf32>
    %c0 = arith.constant 0 : index
    %c0_3 = arith.constant 0 : index
    %c0_4 = arith.constant 0 : index
    %9 = vector.load %arg1[%c0, %c0_3, %c0_4] : memref<2x4x16xf32, #tpu.memory_space<vmem>>, vector<1x4x16xf32>
    %10 = vector.shape_cast %9 : vector<1x4x16xf32> to vector<4x16xf32>
    %c1_i32 = arith.constant 1 : i32
    %11 = tpu.dynamic_rotate %10 by %c1_i32 dim 1 : vector<4x16xf32>, i32 -> vector<4x16xf32>
    %cst_5 = arith.constant 0.000000e+00 : f32
    %12 = vector.shape_cast %2 : vector<1x16xi1> to vector<1x16xi1>
    %13 = vector.broadcast %12 : vector<1x16xi1> to vector<4x16xi1>
    %14 = vector.broadcast %cst_5 : f32 to vector<4x16xf32>
    %15 = arith.select %13, %14, %11 : vector<4x16xi1>, vector<4x16xf32>
    %c15_i32_6 = arith.constant 15 : i32
    %16 = tpu.dynamic_rotate %10 by %c15_i32_6 dim 1 : vector<4x16xf32>, i32 -> vector<4x16xf32>
    %cst_7 = arith.constant 0.000000e+00 : f32
    %17 = vector.shape_cast %4 : vector<1x16xi1> to vector<1x16xi1>
    %18 = vector.broadcast %17 : vector<1x16xi1> to vector<4x16xi1>
    %19 = vector.broadcast %cst_7 : f32 to vector<4x16xf32>
    %20 = arith.select %18, %19, %16 : vector<4x16xi1>, vector<4x16xf32>
    %c0_8 = arith.constant 0 : index
    %c0_9 = arith.constant 0 : index
    %c0_10 = arith.constant 0 : index
    %21 = vector.load %arg2[%c0_8, %c0_9, %c0_10] : memref<3x8x4xf32, #tpu.memory_space<vmem>>, vector<1x8x4xf32>
    %22 = vector.shape_cast %21 : vector<1x8x4xf32> to vector<8x4xf32>
    %cst_11 = arith.constant dense<0.000000e+00> : vector<8x16xf32>
    %23 = tpu.matmul %22, %15, %cst_11 {dimension_numbers = #tpu.dot_dimension_numbers<[1], [0], [0], [1], [0, 0, 1, 1], [], []>} : vector<8x4xf32>, vector<4x16xf32>, vector<8x16xf32> -> vector<8x16xf32>
    %c1 = arith.constant 1 : index
    %c0_12 = arith.constant 0 : index
    %c0_13 = arith.constant 0 : index
    %24 = vector.load %arg2[%c1, %c0_12, %c0_13] : memref<3x8x4xf32, #tpu.memory_space<vmem>>, vector<1x8x4xf32>
    %25 = vector.shape_cast %24 : vector<1x8x4xf32> to vector<8x4xf32>
    %cst_14 = arith.constant dense<0.000000e+00> : vector<8x16xf32>
    %26 = tpu.matmul %25, %10, %cst_14 {dimension_numbers = #tpu.dot_dimension_numbers<[1], [0], [0], [1], [0, 0, 1, 1], [], []>} : vector<8x4xf32>, vector<4x16xf32>, vector<8x16xf32> -> vector<8x16xf32>
    %27 = arith.addf %23, %26 : vector<8x16xf32>
    %c2 = arith.constant 2 : index
    %c0_15 = arith.constant 0 : index
    %c0_16 = arith.constant 0 : index
    %28 = vector.load %arg2[%c2, %c0_15, %c0_16] : memref<3x8x4xf32, #tpu.memory_space<vmem>>, vector<1x8x4xf32>
    %29 = vector.shape_cast %28 : vector<1x8x4xf32> to vector<8x4xf32>
    %cst_17 = arith.constant dense<0.000000e+00> : vector<8x16xf32>
    %30 = tpu.matmul %29, %20, %cst_17 {dimension_numbers = #tpu.dot_dimension_numbers<[1], [0], [0], [1], [0, 0, 1, 1], [], []>} : vector<8x4xf32>, vector<4x16xf32>, vector<8x16xf32> -> vector<8x16xf32>
    %31 = arith.addf %27, %30 : vector<8x16xf32>
    %c0_18 = arith.constant 0 : index
    %c0_19 = arith.constant 0 : index
    %32 = vector.load %arg3[%c0_18, %c0_19] : memref<8x4xf32, #tpu.memory_space<vmem>>, vector<8x4xf32>
    %cst_20 = arith.constant dense<0.000000e+00> : vector<8x16xf32>
    %33 = tpu.matmul %32, %10, %cst_20 {dimension_numbers = #tpu.dot_dimension_numbers<[1], [0], [0], [1], [0, 0, 1, 1], [], []>} : vector<8x4xf32>, vector<4x16xf32>, vector<8x16xf32> -> vector<8x16xf32>
    %cst_21 = arith.constant dense<0.000000e+00> : vector<8xf32>
    %34 = vector.multi_reduction <add>, %31, %cst_21 [1] : vector<8x16xf32> to vector<8xf32>
    %35 = vector.shape_cast %34 : vector<8xf32> to vector<8x1xf32>
    %36 = arith.addf %5, %35 : vector<8x1xf32>
    %37 = arith.mulf %31, %31 : vector<8x16xf32>
    %cst_22 = arith.constant dense<0.000000e+00> : vector<8xf32>
    %38 = vector.multi_reduction <add>, %37, %cst_22 [1] : vector<8x16xf32> to vector<8xf32>
    %39 = vector.shape_cast %38 : vector<8xf32> to vector<8x1xf32>
    %40 = arith.addf %6, %39 : vector<8x1xf32>
    %cst_23 = arith.constant dense<0.000000e+00> : vector<8xf32>
    %41 = vector.multi_reduction <add>, %33, %cst_23 [1] : vector<8x16xf32> to vector<8xf32>
    %42 = vector.shape_cast %41 : vector<8xf32> to vector<8x1xf32>
    %43 = arith.addf %7, %42 : vector<8x1xf32>
    %44 = arith.mulf %33, %33 : vector<8x16xf32>
    %cst_24 = arith.constant dense<0.000000e+00> : vector<8xf32>
    %45 = vector.multi_reduction <add>, %44, %cst_24 [1] : vector<8x16xf32> to vector<8xf32>
    %46 = vector.shape_cast %45 : vector<8xf32> to vector<8x1xf32>
    %47 = arith.addf %8, %46 : vector<8x1xf32>
    %c1_25 = arith.constant 1 : index
    %c0_26 = arith.constant 0 : index
    %c0_27 = arith.constant 0 : index
    %48 = vector.load %arg1[%c1_25, %c0_26, %c0_27] : memref<2x4x16xf32, #tpu.memory_space<vmem>>, vector<1x4x16xf32>
    %49 = vector.shape_cast %48 : vector<1x4x16xf32> to vector<4x16xf32>
    %c1_i32_28 = arith.constant 1 : i32
    %50 = tpu.dynamic_rotate %49 by %c1_i32_28 dim 1 : vector<4x16xf32>, i32 -> vector<4x16xf32>
    %cst_29 = arith.constant 0.000000e+00 : f32
    %51 = vector.shape_cast %2 : vector<1x16xi1> to vector<1x16xi1>
    %52 = vector.broadcast %51 : vector<1x16xi1> to vector<4x16xi1>
    %53 = vector.broadcast %cst_29 : f32 to vector<4x16xf32>
    %54 = arith.select %52, %53, %50 : vector<4x16xi1>, vector<4x16xf32>
    %c15_i32_30 = arith.constant 15 : i32
    %55 = tpu.dynamic_rotate %49 by %c15_i32_30 dim 1 : vector<4x16xf32>, i32 -> vector<4x16xf32>
    %cst_31 = arith.constant 0.000000e+00 : f32
    %56 = vector.shape_cast %4 : vector<1x16xi1> to vector<1x16xi1>
    %57 = vector.broadcast %56 : vector<1x16xi1> to vector<4x16xi1>
    %58 = vector.broadcast %cst_31 : f32 to vector<4x16xf32>
    %59 = arith.select %57, %58, %55 : vector<4x16xi1>, vector<4x16xf32>
    %c0_32 = arith.constant 0 : index
    %c0_33 = arith.constant 0 : index
    %c0_34 = arith.constant 0 : index
    %60 = vector.load %arg2[%c0_32, %c0_33, %c0_34] : memref<3x8x4xf32, #tpu.memory_space<vmem>>, vector<1x8x4xf32>
    %61 = vector.shape_cast %60 : vector<1x8x4xf32> to vector<8x4xf32>
    %cst_35 = arith.constant dense<0.000000e+00> : vector<8x16xf32>
    %62 = tpu.matmul %61, %54, %cst_35 {dimension_numbers = #tpu.dot_dimension_numbers<[1], [0], [0], [1], [0, 0, 1, 1], [], []>} : vector<8x4xf32>, vector<4x16xf32>, vector<8x16xf32> -> vector<8x16xf32>
    %c1_36 = arith.constant 1 : index
    %c0_37 = arith.constant 0 : index
    %c0_38 = arith.constant 0 : index
    %63 = vector.load %arg2[%c1_36, %c0_37, %c0_38] : memref<3x8x4xf32, #tpu.memory_space<vmem>>, vector<1x8x4xf32>
    %64 = vector.shape_cast %63 : vector<1x8x4xf32> to vector<8x4xf32>
    %cst_39 = arith.constant dense<0.000000e+00> : vector<8x16xf32>
    %65 = tpu.matmul %64, %49, %cst_39 {dimension_numbers = #tpu.dot_dimension_numbers<[1], [0], [0], [1], [0, 0, 1, 1], [], []>} : vector<8x4xf32>, vector<4x16xf32>, vector<8x16xf32> -> vector<8x16xf32>
    %66 = arith.addf %62, %65 : vector<8x16xf32>
    %c2_40 = arith.constant 2 : index
    %c0_41 = arith.constant 0 : index
    %c0_42 = arith.constant 0 : index
    %67 = vector.load %arg2[%c2_40, %c0_41, %c0_42] : memref<3x8x4xf32, #tpu.memory_space<vmem>>, vector<1x8x4xf32>
    %68 = vector.shape_cast %67 : vector<1x8x4xf32> to vector<8x4xf32>
    %cst_43 = arith.constant dense<0.000000e+00> : vector<8x16xf32>
    %69 = tpu.matmul %68, %59, %cst_43 {dimension_numbers = #tpu.dot_dimension_numbers<[1], [0], [0], [1], [0, 0, 1, 1], [], []>} : vector<8x4xf32>, vector<4x16xf32>, vector<8x16xf32> -> vector<8x16xf32>
    %70 = arith.addf %66, %69 : vector<8x16xf32>
    %c0_44 = arith.constant 0 : index
    %c0_45 = arith.constant 0 : index
    %71 = vector.load %arg3[%c0_44, %c0_45] : memref<8x4xf32, #tpu.memory_space<vmem>>, vector<8x4xf32>
    %cst_46 = arith.constant dense<0.000000e+00> : vector<8x16xf32>
    %72 = tpu.matmul %71, %49, %cst_46 {dimension_numbers = #tpu.dot_dimension_numbers<[1], [0], [0], [1], [0, 0, 1, 1], [], []>} : vector<8x4xf32>, vector<4x16xf32>, vector<8x16xf32> -> vector<8x16xf32>
    %cst_47 = arith.constant dense<0.000000e+00> : vector<8xf32>
    %73 = vector.multi_reduction <add>, %70, %cst_47 [1] : vector<8x16xf32> to vector<8xf32>
    %74 = vector.shape_cast %73 : vector<8xf32> to vector<8x1xf32>
    %75 = arith.addf %36, %74 : vector<8x1xf32>
    %76 = arith.mulf %70, %70 : vector<8x16xf32>
    %cst_48 = arith.constant dense<0.000000e+00> : vector<8xf32>
    %77 = vector.multi_reduction <add>, %76, %cst_48 [1] : vector<8x16xf32> to vector<8xf32>
    %78 = vector.shape_cast %77 : vector<8xf32> to vector<8x1xf32>
    %79 = arith.addf %40, %78 : vector<8x1xf32>
    %cst_49 = arith.constant dense<0.000000e+00> : vector<8xf32>
    %80 = vector.multi_reduction <add>, %72, %cst_49 [1] : vector<8x16xf32> to vector<8xf32>
    %81 = vector.shape_cast %80 : vector<8xf32> to vector<8x1xf32>
    %82 = arith.addf %43, %81 : vector<8x1xf32>
    %83 = arith.mulf %72, %72 : vector<8x16xf32>
    %cst_50 = arith.constant dense<0.000000e+00> : vector<8xf32>
    %84 = vector.multi_reduction <add>, %83, %cst_50 [1] : vector<8x16xf32> to vector<8xf32>
    %85 = vector.shape_cast %84 : vector<8xf32> to vector<8x1xf32>
    %86 = arith.addf %47, %85 : vector<8x1xf32>
    %c0_51 = arith.constant 0 : index
    %c0_52 = arith.constant 0 : index
    %c0_53 = arith.constant 0 : index
    %87 = vector.load %arg4[%c0_51, %c0_52, %c0_53] : memref<1x8x4xf32, #tpu.memory_space<vmem>>, vector<1x8x1xf32>
    %88 = vector.shape_cast %87 : vector<1x8x1xf32> to vector<8x1xf32>
    %89 = vector.shape_cast %75 : vector<8x1xf32> to vector<1x8x1xf32>
    tpu.vector_store %arg4[%c0_51, %c0_52, %c0_53], %89 {strides = array<i32>} : memref<1x8x4xf32, #tpu.memory_space<vmem>>, vector<1x8x1xf32>,
    %c0_54 = arith.constant 0 : index
    %c0_55 = arith.constant 0 : index
    %c1_56 = arith.constant 1 : index
    %90 = vector.load %arg4[%c0_54, %c0_55, %c1_56] : memref<1x8x4xf32, #tpu.memory_space<vmem>>, vector<1x8x1xf32>
    %91 = vector.shape_cast %90 : vector<1x8x1xf32> to vector<8x1xf32>
    %92 = vector.shape_cast %79 : vector<8x1xf32> to vector<1x8x1xf32>
    tpu.vector_store %arg4[%c0_54, %c0_55, %c1_56], %92 {strides = array<i32>} : memref<1x8x4xf32, #tpu.memory_space<vmem>>, vector<1x8x1xf32>,
    %c0_57 = arith.constant 0 : index
    %c0_58 = arith.constant 0 : index
    %c2_59 = arith.constant 2 : index
    %93 = vector.load %arg4[%c0_57, %c0_58, %c2_59] : memref<1x8x4xf32, #tpu.memory_space<vmem>>, vector<1x8x1xf32>
    %94 = vector.shape_cast %93 : vector<1x8x1xf32> to vector<8x1xf32>
    %95 = vector.shape_cast %82 : vector<8x1xf32> to vector<1x8x1xf32>
    tpu.vector_store %arg4[%c0_57, %c0_58, %c2_59], %95 {strides = array<i32>} : memref<1x8x4xf32, #tpu.memory_space<vmem>>, vector<1x8x1xf32>,
    %c0_60 = arith.constant 0 : index
    %c0_61 = arith.constant 0 : index
    %c3 = arith.constant 3 : index
    %96 = vector.load %arg4[%c0_60, %c0_61, %c3] : memref<1x8x4xf32, #tpu.memory_space<vmem>>, vector<1x8x1xf32>
    %97 = vector.shape_cast %96 : vector<1x8x1xf32> to vector<8x1xf32>
    %98 = vector.shape_cast %86 : vector<8x1xf32> to vector<1x8x1xf32>
    tpu.vector_store %arg4[%c0_60, %c0_61, %c3], %98 {strides = array<i32>} : memref<1x8x4xf32, #tpu.memory_space<vmem>>, vector<1x8x1xf32>,
    return
  }
  func.func @transform_0(%arg0: i32) -> (i32, i32, i32) {
    %c0_i32 = arith.constant 0 : i32
    %c0_i32_0 = arith.constant 0 : i32
    %c0_i32_1 = arith.constant 0 : i32
    return %arg0, %c0_i32, %c0_i32_0 : i32, i32, i32
  }
  func.func @transform_1(%arg0: i32) -> (i32, i32, i32) {
    %c0_i32 = arith.constant 0 : i32
    %c0_i32_0 = arith.constant 0 : i32
    %c0_i32_1 = arith.constant 0 : i32
    %c0_i32_2 = arith.constant 0 : i32
    return %c0_i32, %c0_i32_0, %c0_i32_1 : i32, i32, i32
  }
  func.func @transform_2(%arg0: i32) -> (i32, i32) {
    %c0_i32 = arith.constant 0 : i32
    %c0_i32_0 = arith.constant 0 : i32
    %c0_i32_1 = arith.constant 0 : i32
    return %c0_i32, %c0_i32_0 : i32, i32
  }
  func.func @transform_3(%arg0: i32) -> (i32, i32, i32) {
    %c0_i32 = arith.constant 0 : i32
    %c0_i32_0 = arith.constant 0 : i32
    %c0_i32_1 = arith.constant 0 : i32
    return %arg0, %c0_i32, %c0_i32_0 : i32, i32, i32
  }
}

module attributes {stable_mosaic.version = 11 : i64} {
  func.func @_mid_kernel(%arg0: i32, %arg1: memref<2x4x16xf32, #tpu.memory_space<vmem>>, %arg2: memref<3x8x4xf32, #tpu.memory_space<vmem>>, %arg3: memref<8x24xf32, #tpu.memory_space<vmem>>, %arg4: memref<8x1xf32, #tpu.memory_space<vmem>>, %arg5: memref<8x1xf32, #tpu.memory_space<vmem>>, %arg6: memref<2x8x16xbf16, #tpu.memory_space<vmem>>, %arg7: memref<1x8x2xf32, #tpu.memory_space<vmem>>) attributes {dimension_semantics = [#tpu.dimension_semantics<parallel>], iteration_bounds = array<i64: 1>, scalar_prefetch = 0 : i64, scratch_operands = 0 : i64, tpu.core_type = #tpu.core_type<tc>, window_params = [{transform_indices = @transform_0, window_bounds = array<i64: 2, 4, 16>}, {pipeline_mode = #tpu.pipeline_mode<synchronous>, transform_indices = @transform_1, window_bounds = array<i64: 3, 8, 4>}, {pipeline_mode = #tpu.pipeline_mode<synchronous>, transform_indices = @transform_2, window_bounds = array<i64: 8, 24>}, {pipeline_mode = #tpu.pipeline_mode<synchronous>, transform_indices = @transform_3, window_bounds = array<i64: 8, 1>}, {pipeline_mode = #tpu.pipeline_mode<synchronous>, transform_indices = @transform_4, window_bounds = array<i64: 8, 1>}, {transform_indices = @transform_5, window_bounds = array<i64: 2, 8, 16>}, {transform_indices = @transform_6, window_bounds = array<i64: 1, 8, 2>}]} {
    %0 = tpu.iota {dimensions = array<i32: 1>} : vector<1x16xi32>
    %c0_i32 = arith.constant 0 : i32
    %1 = vector.broadcast %c0_i32 : i32 to vector<1x16xi32>
    %2 = arith.cmpi eq, %0, %1 : vector<1x16xi32>
    %c15_i32 = arith.constant 15 : i32
    %3 = vector.broadcast %c15_i32 : i32 to vector<1x16xi32>
    %4 = arith.cmpi eq, %0, %3 : vector<1x16xi32>
    %cst = arith.constant 0.000000e+00 : f32
    %5 = vector.broadcast %cst : f32 to vector<8x1xf32>
    %cst_0 = arith.constant 0.000000e+00 : f32
    %6 = vector.broadcast %cst_0 : f32 to vector<8x1xf32>
    %c0 = arith.constant 0 : index
    %c0_1 = arith.constant 0 : index
    %c0_2 = arith.constant 0 : index
    %7 = vector.load %arg1[%c0, %c0_1, %c0_2] : memref<2x4x16xf32, #tpu.memory_space<vmem>>, vector<1x4x16xf32>
    %8 = vector.shape_cast %7 : vector<1x4x16xf32> to vector<4x16xf32>
    %c1_i32 = arith.constant 1 : i32
    %9 = tpu.dynamic_rotate %8 by %c1_i32 dim 1 : vector<4x16xf32>, i32 -> vector<4x16xf32>
    %cst_3 = arith.constant 0.000000e+00 : f32
    %10 = vector.shape_cast %2 : vector<1x16xi1> to vector<1x16xi1>
    %11 = vector.broadcast %10 : vector<1x16xi1> to vector<4x16xi1>
    %12 = vector.broadcast %cst_3 : f32 to vector<4x16xf32>
    %13 = arith.select %11, %12, %9 : vector<4x16xi1>, vector<4x16xf32>
    %c15_i32_4 = arith.constant 15 : i32
    %14 = tpu.dynamic_rotate %8 by %c15_i32_4 dim 1 : vector<4x16xf32>, i32 -> vector<4x16xf32>
    %cst_5 = arith.constant 0.000000e+00 : f32
    %15 = vector.shape_cast %4 : vector<1x16xi1> to vector<1x16xi1>
    %16 = vector.broadcast %15 : vector<1x16xi1> to vector<4x16xi1>
    %17 = vector.broadcast %cst_5 : f32 to vector<4x16xf32>
    %18 = arith.select %16, %17, %14 : vector<4x16xi1>, vector<4x16xf32>
    %c0_6 = arith.constant 0 : index
    %c0_7 = arith.constant 0 : index
    %c0_8 = arith.constant 0 : index
    %19 = vector.load %arg2[%c0_6, %c0_7, %c0_8] : memref<3x8x4xf32, #tpu.memory_space<vmem>>, vector<1x8x4xf32>
    %20 = vector.shape_cast %19 : vector<1x8x4xf32> to vector<8x4xf32>
    %cst_9 = arith.constant dense<0.000000e+00> : vector<8x16xf32>
    %21 = tpu.matmul %20, %13, %cst_9 {dimension_numbers = #tpu.dot_dimension_numbers<[1], [0], [0], [1], [0, 0, 1, 1], [], []>} : vector<8x4xf32>, vector<4x16xf32>, vector<8x16xf32> -> vector<8x16xf32>
    %c1 = arith.constant 1 : index
    %c0_10 = arith.constant 0 : index
    %c0_11 = arith.constant 0 : index
    %22 = vector.load %arg2[%c1, %c0_10, %c0_11] : memref<3x8x4xf32, #tpu.memory_space<vmem>>, vector<1x8x4xf32>
    %23 = vector.shape_cast %22 : vector<1x8x4xf32> to vector<8x4xf32>
    %cst_12 = arith.constant dense<0.000000e+00> : vector<8x16xf32>
    %24 = tpu.matmul %23, %8, %cst_12 {dimension_numbers = #tpu.dot_dimension_numbers<[1], [0], [0], [1], [0, 0, 1, 1], [], []>} : vector<8x4xf32>, vector<4x16xf32>, vector<8x16xf32> -> vector<8x16xf32>
    %25 = arith.addf %21, %24 : vector<8x16xf32>
    %c2 = arith.constant 2 : index
    %c0_13 = arith.constant 0 : index
    %c0_14 = arith.constant 0 : index
    %26 = vector.load %arg2[%c2, %c0_13, %c0_14] : memref<3x8x4xf32, #tpu.memory_space<vmem>>, vector<1x8x4xf32>
    %27 = vector.shape_cast %26 : vector<1x8x4xf32> to vector<8x4xf32>
    %cst_15 = arith.constant dense<0.000000e+00> : vector<8x16xf32>
    %28 = tpu.matmul %27, %18, %cst_15 {dimension_numbers = #tpu.dot_dimension_numbers<[1], [0], [0], [1], [0, 0, 1, 1], [], []>} : vector<8x4xf32>, vector<4x16xf32>, vector<8x16xf32> -> vector<8x16xf32>
    %29 = arith.addf %25, %28 : vector<8x16xf32>
    %c0_16 = arith.constant 0 : index
    %c0_17 = arith.constant 0 : index
    %30 = vector.load %arg4[%c0_16, %c0_17] : memref<8x1xf32, #tpu.memory_space<vmem>>, vector<8x1xf32>
    %31 = vector.broadcast %30 : vector<8x1xf32> to vector<8x16xf32>
    %32 = arith.mulf %29, %31 : vector<8x16xf32>
    %c0_18 = arith.constant 0 : index
    %c0_19 = arith.constant 0 : index
    %33 = vector.load %arg5[%c0_18, %c0_19] : memref<8x1xf32, #tpu.memory_space<vmem>>, vector<8x1xf32>
    %34 = vector.broadcast %33 : vector<8x1xf32> to vector<8x16xf32>
    %35 = arith.addf %32, %34 : vector<8x16xf32>
    %cst_20 = arith.constant 0.000000e+00 : f32
    %36 = vector.broadcast %cst_20 : f32 to vector<8x16xf32>
    %37 = arith.maximumf %35, %36 : vector<8x16xf32>
    %c1_i32_21 = arith.constant 1 : i32
    %38 = tpu.dynamic_rotate %37 by %c1_i32_21 dim 1 : vector<8x16xf32>, i32 -> vector<8x16xf32>
    %cst_22 = arith.constant 0.000000e+00 : f32
    %39 = vector.shape_cast %2 : vector<1x16xi1> to vector<1x16xi1>
    %40 = vector.broadcast %39 : vector<1x16xi1> to vector<8x16xi1>
    %41 = vector.broadcast %cst_22 : f32 to vector<8x16xf32>
    %42 = arith.select %40, %41, %38 : vector<8x16xi1>, vector<8x16xf32>
    %c15_i32_23 = arith.constant 15 : i32
    %43 = tpu.dynamic_rotate %37 by %c15_i32_23 dim 1 : vector<8x16xf32>, i32 -> vector<8x16xf32>
    %cst_24 = arith.constant 0.000000e+00 : f32
    %44 = vector.shape_cast %4 : vector<1x16xi1> to vector<1x16xi1>
    %45 = vector.broadcast %44 : vector<1x16xi1> to vector<8x16xi1>
    %46 = vector.broadcast %cst_24 : f32 to vector<8x16xf32>
    %47 = arith.select %45, %46, %43 : vector<8x16xi1>, vector<8x16xf32>
    %48 = tpu.concatenate %42, %37, %47 in 0 : vector<8x16xf32>, vector<8x16xf32>, vector<8x16xf32> -> vector<24x16xf32>
    %c0_25 = arith.constant 0 : index
    %c0_26 = arith.constant 0 : index
    %49 = vector.load %arg3[%c0_25, %c0_26] : memref<8x24xf32, #tpu.memory_space<vmem>>, vector<8x24xf32>
    %cst_27 = arith.constant dense<0.000000e+00> : vector<8x16xf32>
    %50 = tpu.matmul %49, %48, %cst_27 {dimension_numbers = #tpu.dot_dimension_numbers<[1], [0], [0], [1], [0, 0, 1, 1], [], []>} : vector<8x24xf32>, vector<24x16xf32>, vector<8x16xf32> -> vector<8x16xf32>
    %51 = arith.truncf %50 : vector<8x16xf32> to vector<8x16xbf16>
    %c0_28 = arith.constant 0 : index
    %c0_29 = arith.constant 0 : index
    %c0_30 = arith.constant 0 : index
    %52 = vector.load %arg6[%c0_28, %c0_29, %c0_30] : memref<2x8x16xbf16, #tpu.memory_space<vmem>>, vector<1x8x16xbf16>
    %53 = vector.shape_cast %52 : vector<1x8x16xbf16> to vector<8x16xbf16>
    %54 = vector.shape_cast %51 : vector<8x16xbf16> to vector<1x8x16xbf16>
    tpu.vector_store %arg6[%c0_28, %c0_29, %c0_30], %54 {strides = array<i32>} : memref<2x8x16xbf16, #tpu.memory_space<vmem>>, vector<1x8x16xbf16>,
    %cst_31 = arith.constant dense<0.000000e+00> : vector<8xf32>
    %55 = vector.multi_reduction <add>, %50, %cst_31 [1] : vector<8x16xf32> to vector<8xf32>
    %56 = vector.shape_cast %55 : vector<8xf32> to vector<8x1xf32>
    %57 = arith.addf %5, %56 : vector<8x1xf32>
    %58 = arith.mulf %50, %50 : vector<8x16xf32>
    %cst_32 = arith.constant dense<0.000000e+00> : vector<8xf32>
    %59 = vector.multi_reduction <add>, %58, %cst_32 [1] : vector<8x16xf32> to vector<8xf32>
    %60 = vector.shape_cast %59 : vector<8xf32> to vector<8x1xf32>
    %61 = arith.addf %6, %60 : vector<8x1xf32>
    %c1_33 = arith.constant 1 : index
    %c0_34 = arith.constant 0 : index
    %c0_35 = arith.constant 0 : index
    %62 = vector.load %arg1[%c1_33, %c0_34, %c0_35] : memref<2x4x16xf32, #tpu.memory_space<vmem>>, vector<1x4x16xf32>
    %63 = vector.shape_cast %62 : vector<1x4x16xf32> to vector<4x16xf32>
    %c1_i32_36 = arith.constant 1 : i32
    %64 = tpu.dynamic_rotate %63 by %c1_i32_36 dim 1 : vector<4x16xf32>, i32 -> vector<4x16xf32>
    %cst_37 = arith.constant 0.000000e+00 : f32
    %65 = vector.shape_cast %2 : vector<1x16xi1> to vector<1x16xi1>
    %66 = vector.broadcast %65 : vector<1x16xi1> to vector<4x16xi1>
    %67 = vector.broadcast %cst_37 : f32 to vector<4x16xf32>
    %68 = arith.select %66, %67, %64 : vector<4x16xi1>, vector<4x16xf32>
    %c15_i32_38 = arith.constant 15 : i32
    %69 = tpu.dynamic_rotate %63 by %c15_i32_38 dim 1 : vector<4x16xf32>, i32 -> vector<4x16xf32>
    %cst_39 = arith.constant 0.000000e+00 : f32
    %70 = vector.shape_cast %4 : vector<1x16xi1> to vector<1x16xi1>
    %71 = vector.broadcast %70 : vector<1x16xi1> to vector<4x16xi1>
    %72 = vector.broadcast %cst_39 : f32 to vector<4x16xf32>
    %73 = arith.select %71, %72, %69 : vector<4x16xi1>, vector<4x16xf32>
    %c0_40 = arith.constant 0 : index
    %c0_41 = arith.constant 0 : index
    %c0_42 = arith.constant 0 : index
    %74 = vector.load %arg2[%c0_40, %c0_41, %c0_42] : memref<3x8x4xf32, #tpu.memory_space<vmem>>, vector<1x8x4xf32>
    %75 = vector.shape_cast %74 : vector<1x8x4xf32> to vector<8x4xf32>
    %cst_43 = arith.constant dense<0.000000e+00> : vector<8x16xf32>
    %76 = tpu.matmul %75, %68, %cst_43 {dimension_numbers = #tpu.dot_dimension_numbers<[1], [0], [0], [1], [0, 0, 1, 1], [], []>} : vector<8x4xf32>, vector<4x16xf32>, vector<8x16xf32> -> vector<8x16xf32>
    %c1_44 = arith.constant 1 : index
    %c0_45 = arith.constant 0 : index
    %c0_46 = arith.constant 0 : index
    %77 = vector.load %arg2[%c1_44, %c0_45, %c0_46] : memref<3x8x4xf32, #tpu.memory_space<vmem>>, vector<1x8x4xf32>
    %78 = vector.shape_cast %77 : vector<1x8x4xf32> to vector<8x4xf32>
    %cst_47 = arith.constant dense<0.000000e+00> : vector<8x16xf32>
    %79 = tpu.matmul %78, %63, %cst_47 {dimension_numbers = #tpu.dot_dimension_numbers<[1], [0], [0], [1], [0, 0, 1, 1], [], []>} : vector<8x4xf32>, vector<4x16xf32>, vector<8x16xf32> -> vector<8x16xf32>
    %80 = arith.addf %76, %79 : vector<8x16xf32>
    %c2_48 = arith.constant 2 : index
    %c0_49 = arith.constant 0 : index
    %c0_50 = arith.constant 0 : index
    %81 = vector.load %arg2[%c2_48, %c0_49, %c0_50] : memref<3x8x4xf32, #tpu.memory_space<vmem>>, vector<1x8x4xf32>
    %82 = vector.shape_cast %81 : vector<1x8x4xf32> to vector<8x4xf32>
    %cst_51 = arith.constant dense<0.000000e+00> : vector<8x16xf32>
    %83 = tpu.matmul %82, %73, %cst_51 {dimension_numbers = #tpu.dot_dimension_numbers<[1], [0], [0], [1], [0, 0, 1, 1], [], []>} : vector<8x4xf32>, vector<4x16xf32>, vector<8x16xf32> -> vector<8x16xf32>
    %84 = arith.addf %80, %83 : vector<8x16xf32>
    %c0_52 = arith.constant 0 : index
    %c0_53 = arith.constant 0 : index
    %85 = vector.load %arg4[%c0_52, %c0_53] : memref<8x1xf32, #tpu.memory_space<vmem>>, vector<8x1xf32>
    %86 = vector.broadcast %85 : vector<8x1xf32> to vector<8x16xf32>
    %87 = arith.mulf %84, %86 : vector<8x16xf32>
    %c0_54 = arith.constant 0 : index
    %c0_55 = arith.constant 0 : index
    %88 = vector.load %arg5[%c0_54, %c0_55] : memref<8x1xf32, #tpu.memory_space<vmem>>, vector<8x1xf32>
    %89 = vector.broadcast %88 : vector<8x1xf32> to vector<8x16xf32>
    %90 = arith.addf %87, %89 : vector<8x16xf32>
    %cst_56 = arith.constant 0.000000e+00 : f32
    %91 = vector.broadcast %cst_56 : f32 to vector<8x16xf32>
    %92 = arith.maximumf %90, %91 : vector<8x16xf32>
    %c1_i32_57 = arith.constant 1 : i32
    %93 = tpu.dynamic_rotate %92 by %c1_i32_57 dim 1 : vector<8x16xf32>, i32 -> vector<8x16xf32>
    %cst_58 = arith.constant 0.000000e+00 : f32
    %94 = vector.shape_cast %2 : vector<1x16xi1> to vector<1x16xi1>
    %95 = vector.broadcast %94 : vector<1x16xi1> to vector<8x16xi1>
    %96 = vector.broadcast %cst_58 : f32 to vector<8x16xf32>
    %97 = arith.select %95, %96, %93 : vector<8x16xi1>, vector<8x16xf32>
    %c15_i32_59 = arith.constant 15 : i32
    %98 = tpu.dynamic_rotate %92 by %c15_i32_59 dim 1 : vector<8x16xf32>, i32 -> vector<8x16xf32>
    %cst_60 = arith.constant 0.000000e+00 : f32
    %99 = vector.shape_cast %4 : vector<1x16xi1> to vector<1x16xi1>
    %100 = vector.broadcast %99 : vector<1x16xi1> to vector<8x16xi1>
    %101 = vector.broadcast %cst_60 : f32 to vector<8x16xf32>
    %102 = arith.select %100, %101, %98 : vector<8x16xi1>, vector<8x16xf32>
    %103 = tpu.concatenate %97, %92, %102 in 0 : vector<8x16xf32>, vector<8x16xf32>, vector<8x16xf32> -> vector<24x16xf32>
    %c0_61 = arith.constant 0 : index
    %c0_62 = arith.constant 0 : index
    %104 = vector.load %arg3[%c0_61, %c0_62] : memref<8x24xf32, #tpu.memory_space<vmem>>, vector<8x24xf32>
    %cst_63 = arith.constant dense<0.000000e+00> : vector<8x16xf32>
    %105 = tpu.matmul %104, %103, %cst_63 {dimension_numbers = #tpu.dot_dimension_numbers<[1], [0], [0], [1], [0, 0, 1, 1], [], []>} : vector<8x24xf32>, vector<24x16xf32>, vector<8x16xf32> -> vector<8x16xf32>
    %106 = arith.truncf %105 : vector<8x16xf32> to vector<8x16xbf16>
    %c1_64 = arith.constant 1 : index
    %c0_65 = arith.constant 0 : index
    %c0_66 = arith.constant 0 : index
    %107 = vector.load %arg6[%c1_64, %c0_65, %c0_66] : memref<2x8x16xbf16, #tpu.memory_space<vmem>>, vector<1x8x16xbf16>
    %108 = vector.shape_cast %107 : vector<1x8x16xbf16> to vector<8x16xbf16>
    %109 = vector.shape_cast %106 : vector<8x16xbf16> to vector<1x8x16xbf16>
    tpu.vector_store %arg6[%c1_64, %c0_65, %c0_66], %109 {strides = array<i32>} : memref<2x8x16xbf16, #tpu.memory_space<vmem>>, vector<1x8x16xbf16>,
    %cst_67 = arith.constant dense<0.000000e+00> : vector<8xf32>
    %110 = vector.multi_reduction <add>, %105, %cst_67 [1] : vector<8x16xf32> to vector<8xf32>
    %111 = vector.shape_cast %110 : vector<8xf32> to vector<8x1xf32>
    %112 = arith.addf %57, %111 : vector<8x1xf32>
    %113 = arith.mulf %105, %105 : vector<8x16xf32>
    %cst_68 = arith.constant dense<0.000000e+00> : vector<8xf32>
    %114 = vector.multi_reduction <add>, %113, %cst_68 [1] : vector<8x16xf32> to vector<8xf32>
    %115 = vector.shape_cast %114 : vector<8xf32> to vector<8x1xf32>
    %116 = arith.addf %61, %115 : vector<8x1xf32>
    %c0_69 = arith.constant 0 : index
    %c0_70 = arith.constant 0 : index
    %c0_71 = arith.constant 0 : index
    %117 = vector.load %arg7[%c0_69, %c0_70, %c0_71] : memref<1x8x2xf32, #tpu.memory_space<vmem>>, vector<1x8x1xf32>
    %118 = vector.shape_cast %117 : vector<1x8x1xf32> to vector<8x1xf32>
    %119 = vector.shape_cast %112 : vector<8x1xf32> to vector<1x8x1xf32>
    tpu.vector_store %arg7[%c0_69, %c0_70, %c0_71], %119 {strides = array<i32>} : memref<1x8x2xf32, #tpu.memory_space<vmem>>, vector<1x8x1xf32>,
    %c0_72 = arith.constant 0 : index
    %c0_73 = arith.constant 0 : index
    %c1_74 = arith.constant 1 : index
    %120 = vector.load %arg7[%c0_72, %c0_73, %c1_74] : memref<1x8x2xf32, #tpu.memory_space<vmem>>, vector<1x8x1xf32>
    %121 = vector.shape_cast %120 : vector<1x8x1xf32> to vector<8x1xf32>
    %122 = vector.shape_cast %116 : vector<8x1xf32> to vector<1x8x1xf32>
    tpu.vector_store %arg7[%c0_72, %c0_73, %c1_74], %122 {strides = array<i32>} : memref<1x8x2xf32, #tpu.memory_space<vmem>>, vector<1x8x1xf32>,
    return
  }
  func.func @transform_0(%arg0: i32) -> (i32, i32, i32) {
    %c0_i32 = arith.constant 0 : i32
    %c0_i32_0 = arith.constant 0 : i32
    %c0_i32_1 = arith.constant 0 : i32
    return %arg0, %c0_i32, %c0_i32_0 : i32, i32, i32
  }
  func.func @transform_1(%arg0: i32) -> (i32, i32, i32) {
    %c0_i32 = arith.constant 0 : i32
    %c0_i32_0 = arith.constant 0 : i32
    %c0_i32_1 = arith.constant 0 : i32
    %c0_i32_2 = arith.constant 0 : i32
    return %c0_i32, %c0_i32_0, %c0_i32_1 : i32, i32, i32
  }
  func.func @transform_2(%arg0: i32) -> (i32, i32) {
    %c0_i32 = arith.constant 0 : i32
    %c0_i32_0 = arith.constant 0 : i32
    %c0_i32_1 = arith.constant 0 : i32
    return %c0_i32, %c0_i32_0 : i32, i32
  }
  func.func @transform_3(%arg0: i32) -> (i32, i32) {
    %c0_i32 = arith.constant 0 : i32
    %c0_i32_0 = arith.constant 0 : i32
    %c0_i32_1 = arith.constant 0 : i32
    return %c0_i32, %c0_i32_0 : i32, i32
  }
  func.func @transform_4(%arg0: i32) -> (i32, i32) {
    %c0_i32 = arith.constant 0 : i32
    %c0_i32_0 = arith.constant 0 : i32
    %c0_i32_1 = arith.constant 0 : i32
    return %c0_i32, %c0_i32_0 : i32, i32
  }
  func.func @transform_5(%arg0: i32) -> (i32, i32, i32) {
    %c0_i32 = arith.constant 0 : i32
    %c0_i32_0 = arith.constant 0 : i32
    %c0_i32_1 = arith.constant 0 : i32
    return %arg0, %c0_i32, %c0_i32_0 : i32, i32, i32
  }
  func.func @transform_6(%arg0: i32) -> (i32, i32, i32) {
    %c0_i32 = arith.constant 0 : i32
    %c0_i32_0 = arith.constant 0 : i32
    %c0_i32_1 = arith.constant 0 : i32
    return %arg0, %c0_i32, %c0_i32_0 : i32, i32, i32
  }
}

module attributes {stable_mosaic.version = 11 : i64} {
  func.func @_final_kernel(%arg0: i32, %arg1: memref<2x4x16xf32, #tpu.memory_space<vmem>>, %arg2: memref<2x8x16xbf16, #tpu.memory_space<vmem>>, %arg3: memref<8x4xf32, #tpu.memory_space<vmem>>, %arg4: memref<8x1xf32, #tpu.memory_space<vmem>>, %arg5: memref<8x1xf32, #tpu.memory_space<vmem>>, %arg6: memref<8x1xf32, #tpu.memory_space<vmem>>, %arg7: memref<8x1xf32, #tpu.memory_space<vmem>>, %arg8: memref<2x8x16xf32, #tpu.memory_space<vmem>>) attributes {dimension_semantics = [#tpu.dimension_semantics<parallel>], iteration_bounds = array<i64: 1>, scalar_prefetch = 0 : i64, scratch_operands = 0 : i64, tpu.core_type = #tpu.core_type<tc>, window_params = [{transform_indices = @transform_0, window_bounds = array<i64: 2, 4, 16>}, {transform_indices = @transform_1, window_bounds = array<i64: 2, 8, 16>}, {pipeline_mode = #tpu.pipeline_mode<synchronous>, transform_indices = @transform_2, window_bounds = array<i64: 8, 4>}, {pipeline_mode = #tpu.pipeline_mode<synchronous>, transform_indices = @transform_3, window_bounds = array<i64: 8, 1>}, {pipeline_mode = #tpu.pipeline_mode<synchronous>, transform_indices = @transform_4, window_bounds = array<i64: 8, 1>}, {pipeline_mode = #tpu.pipeline_mode<synchronous>, transform_indices = @transform_5, window_bounds = array<i64: 8, 1>}, {pipeline_mode = #tpu.pipeline_mode<synchronous>, transform_indices = @transform_6, window_bounds = array<i64: 8, 1>}, {transform_indices = @transform_7, window_bounds = array<i64: 2, 8, 16>}]} {
    %c0 = arith.constant 0 : index
    %c0_0 = arith.constant 0 : index
    %c0_1 = arith.constant 0 : index
    %0 = vector.load %arg1[%c0, %c0_0, %c0_1] : memref<2x4x16xf32, #tpu.memory_space<vmem>>, vector<1x4x16xf32>
    %1 = vector.shape_cast %0 : vector<1x4x16xf32> to vector<4x16xf32>
    %c0_2 = arith.constant 0 : index
    %c0_3 = arith.constant 0 : index
    %2 = vector.load %arg3[%c0_2, %c0_3] : memref<8x4xf32, #tpu.memory_space<vmem>>, vector<8x4xf32>
    %cst = arith.constant dense<0.000000e+00> : vector<8x16xf32>
    %3 = tpu.matmul %2, %1, %cst {dimension_numbers = #tpu.dot_dimension_numbers<[1], [0], [0], [1], [0, 0, 1, 1], [], []>} : vector<8x4xf32>, vector<4x16xf32>, vector<8x16xf32> -> vector<8x16xf32>
    %c0_4 = arith.constant 0 : index
    %c0_5 = arith.constant 0 : index
    %4 = vector.load %arg4[%c0_4, %c0_5] : memref<8x1xf32, #tpu.memory_space<vmem>>, vector<8x1xf32>
    %5 = vector.broadcast %4 : vector<8x1xf32> to vector<8x16xf32>
    %6 = arith.mulf %3, %5 : vector<8x16xf32>
    %c0_6 = arith.constant 0 : index
    %c0_7 = arith.constant 0 : index
    %7 = vector.load %arg5[%c0_6, %c0_7] : memref<8x1xf32, #tpu.memory_space<vmem>>, vector<8x1xf32>
    %8 = vector.broadcast %7 : vector<8x1xf32> to vector<8x16xf32>
    %9 = arith.addf %6, %8 : vector<8x16xf32>
    %c0_8 = arith.constant 0 : index
    %c0_9 = arith.constant 0 : index
    %c0_10 = arith.constant 0 : index
    %10 = vector.load %arg2[%c0_8, %c0_9, %c0_10] : memref<2x8x16xbf16, #tpu.memory_space<vmem>>, vector<1x8x16xbf16>
    %11 = vector.shape_cast %10 : vector<1x8x16xbf16> to vector<8x16xbf16>
    %12 = arith.extf %11 : vector<8x16xbf16> to vector<8x16xf32>
    %c0_11 = arith.constant 0 : index
    %c0_12 = arith.constant 0 : index
    %13 = vector.load %arg6[%c0_11, %c0_12] : memref<8x1xf32, #tpu.memory_space<vmem>>, vector<8x1xf32>
    %14 = vector.broadcast %13 : vector<8x1xf32> to vector<8x16xf32>
    %15 = arith.mulf %12, %14 : vector<8x16xf32>
    %c0_13 = arith.constant 0 : index
    %c0_14 = arith.constant 0 : index
    %16 = vector.load %arg7[%c0_13, %c0_14] : memref<8x1xf32, #tpu.memory_space<vmem>>, vector<8x1xf32>
    %17 = vector.broadcast %16 : vector<8x1xf32> to vector<8x16xf32>
    %18 = arith.addf %15, %17 : vector<8x16xf32>
    %19 = arith.addf %18, %9 : vector<8x16xf32>
    %cst_15 = arith.constant 0.000000e+00 : f32
    %20 = vector.broadcast %cst_15 : f32 to vector<8x16xf32>
    %21 = arith.maximumf %19, %20 : vector<8x16xf32>
    %c0_16 = arith.constant 0 : index
    %c0_17 = arith.constant 0 : index
    %c0_18 = arith.constant 0 : index
    %22 = vector.load %arg8[%c0_16, %c0_17, %c0_18] : memref<2x8x16xf32, #tpu.memory_space<vmem>>, vector<1x8x16xf32>
    %23 = vector.shape_cast %22 : vector<1x8x16xf32> to vector<8x16xf32>
    %24 = vector.shape_cast %21 : vector<8x16xf32> to vector<1x8x16xf32>
    tpu.vector_store %arg8[%c0_16, %c0_17, %c0_18], %24 {strides = array<i32>} : memref<2x8x16xf32, #tpu.memory_space<vmem>>, vector<1x8x16xf32>,
    %c1 = arith.constant 1 : index
    %c0_19 = arith.constant 0 : index
    %c0_20 = arith.constant 0 : index
    %25 = vector.load %arg1[%c1, %c0_19, %c0_20] : memref<2x4x16xf32, #tpu.memory_space<vmem>>, vector<1x4x16xf32>
    %26 = vector.shape_cast %25 : vector<1x4x16xf32> to vector<4x16xf32>
    %c0_21 = arith.constant 0 : index
    %c0_22 = arith.constant 0 : index
    %27 = vector.load %arg3[%c0_21, %c0_22] : memref<8x4xf32, #tpu.memory_space<vmem>>, vector<8x4xf32>
    %cst_23 = arith.constant dense<0.000000e+00> : vector<8x16xf32>
    %28 = tpu.matmul %27, %26, %cst_23 {dimension_numbers = #tpu.dot_dimension_numbers<[1], [0], [0], [1], [0, 0, 1, 1], [], []>} : vector<8x4xf32>, vector<4x16xf32>, vector<8x16xf32> -> vector<8x16xf32>
    %c0_24 = arith.constant 0 : index
    %c0_25 = arith.constant 0 : index
    %29 = vector.load %arg4[%c0_24, %c0_25] : memref<8x1xf32, #tpu.memory_space<vmem>>, vector<8x1xf32>
    %30 = vector.broadcast %29 : vector<8x1xf32> to vector<8x16xf32>
    %31 = arith.mulf %28, %30 : vector<8x16xf32>
    %c0_26 = arith.constant 0 : index
    %c0_27 = arith.constant 0 : index
    %32 = vector.load %arg5[%c0_26, %c0_27] : memref<8x1xf32, #tpu.memory_space<vmem>>, vector<8x1xf32>
    %33 = vector.broadcast %32 : vector<8x1xf32> to vector<8x16xf32>
    %34 = arith.addf %31, %33 : vector<8x16xf32>
    %c1_28 = arith.constant 1 : index
    %c0_29 = arith.constant 0 : index
    %c0_30 = arith.constant 0 : index
    %35 = vector.load %arg2[%c1_28, %c0_29, %c0_30] : memref<2x8x16xbf16, #tpu.memory_space<vmem>>, vector<1x8x16xbf16>
    %36 = vector.shape_cast %35 : vector<1x8x16xbf16> to vector<8x16xbf16>
    %37 = arith.extf %36 : vector<8x16xbf16> to vector<8x16xf32>
    %c0_31 = arith.constant 0 : index
    %c0_32 = arith.constant 0 : index
    %38 = vector.load %arg6[%c0_31, %c0_32] : memref<8x1xf32, #tpu.memory_space<vmem>>, vector<8x1xf32>
    %39 = vector.broadcast %38 : vector<8x1xf32> to vector<8x16xf32>
    %40 = arith.mulf %37, %39 : vector<8x16xf32>
    %c0_33 = arith.constant 0 : index
    %c0_34 = arith.constant 0 : index
    %41 = vector.load %arg7[%c0_33, %c0_34] : memref<8x1xf32, #tpu.memory_space<vmem>>, vector<8x1xf32>
    %42 = vector.broadcast %41 : vector<8x1xf32> to vector<8x16xf32>
    %43 = arith.addf %40, %42 : vector<8x16xf32>
    %44 = arith.addf %43, %34 : vector<8x16xf32>
    %cst_35 = arith.constant 0.000000e+00 : f32
    %45 = vector.broadcast %cst_35 : f32 to vector<8x16xf32>
    %46 = arith.maximumf %44, %45 : vector<8x16xf32>
    %c1_36 = arith.constant 1 : index
    %c0_37 = arith.constant 0 : index
    %c0_38 = arith.constant 0 : index
    %47 = vector.load %arg8[%c1_36, %c0_37, %c0_38] : memref<2x8x16xf32, #tpu.memory_space<vmem>>, vector<1x8x16xf32>
    %48 = vector.shape_cast %47 : vector<1x8x16xf32> to vector<8x16xf32>
    %49 = vector.shape_cast %46 : vector<8x16xf32> to vector<1x8x16xf32>
    tpu.vector_store %arg8[%c1_36, %c0_37, %c0_38], %49 {strides = array<i32>} : memref<2x8x16xf32, #tpu.memory_space<vmem>>, vector<1x8x16xf32>,
    return
  }
  func.func @transform_0(%arg0: i32) -> (i32, i32, i32) {
    %c0_i32 = arith.constant 0 : i32
    %c0_i32_0 = arith.constant 0 : i32
    %c0_i32_1 = arith.constant 0 : i32
    return %arg0, %c0_i32, %c0_i32_0 : i32, i32, i32
  }
  func.func @transform_1(%arg0: i32) -> (i32, i32, i32) {
    %c0_i32 = arith.constant 0 : i32
    %c0_i32_0 = arith.constant 0 : i32
    %c0_i32_1 = arith.constant 0 : i32
    return %arg0, %c0_i32, %c0_i32_0 : i32, i32, i32
  }
  func.func @transform_2(%arg0: i32) -> (i32, i32) {
    %c0_i32 = arith.constant 0 : i32
    %c0_i32_0 = arith.constant 0 : i32
    %c0_i32_1 = arith.constant 0 : i32
    return %c0_i32, %c0_i32_0 : i32, i32
  }
  func.func @transform_3(%arg0: i32) -> (i32, i32) {
    %c0_i32 = arith.constant 0 : i32
    %c0_i32_0 = arith.constant 0 : i32
    %c0_i32_1 = arith.constant 0 : i32
    return %c0_i32, %c0_i32_0 : i32, i32
  }
  func.func @transform_4(%arg0: i32) -> (i32, i32) {
    %c0_i32 = arith.constant 0 : i32
    %c0_i32_0 = arith.constant 0 : i32
    %c0_i32_1 = arith.constant 0 : i32
    return %c0_i32, %c0_i32_0 : i32, i32
  }
  func.func @transform_5(%arg0: i32) -> (i32, i32) {
    %c0_i32 = arith.constant 0 : i32
    %c0_i32_0 = arith.constant 0 : i32
    %c0_i32_1 = arith.constant 0 : i32
    return %c0_i32, %c0_i32_0 : i32, i32
  }
  func.func @transform_6(%arg0: i32) -> (i32, i32) {
    %c0_i32 = arith.constant 0 : i32
    %c0_i32_0 = arith.constant 0 : i32
    %c0_i32_1 = arith.constant 0 : i32
    return %c0_i32, %c0_i32_0 : i32, i32
  }
  func.func @transform_7(%arg0: i32) -> (i32, i32, i32) {
    %c0_i32 = arith.constant 0 : i32
    %c0_i32_0 = arith.constant 0 : i32
    %c0_i32_1 = arith.constant 0 : i32
    return %arg0, %c0_i32, %c0_i32_0 : i32, i32, i32
  }
}

</mosaic_0001>

<llo_original>
// kernel: residual_block_pallas.5
$region0: #{residual_block_pallas.5}
  #allocation0 [shape = 'u32[]', space=smem, size = 0x4, offset = 0x4, fixed_abs, tag = 'smem constant byte address 0x4 - core index']
  #allocation1 [shape = 'u32[144,128]{1,0:T(1,128)}', space=vmem, size = 0x12000, scoped, tag = 'internal scratch']
  %s0 = inlined_call_operand.vmem [shape: f32[2,4,16], index: 0, kind: input, shape index: {}]
  %s1 = inlined_call_operand.vmem [shape: bf16[2,8,16], index: 1, kind: input, shape index: {}]
  %s2 = inlined_call_operand.vmem [shape: f32[8,4], index: 2, kind: input, shape index: {}]
  %s3 = inlined_call_operand.vmem [shape: f32[8,1], index: 3, kind: input, shape index: {}]
  %s4 = inlined_call_operand.vmem [shape: f32[8,1], index: 4, kind: input, shape index: {}]
  %s5 = inlined_call_operand.vmem [shape: f32[8,1], index: 5, kind: input, shape index: {}]
  %s6 = inlined_call_operand.vmem [shape: f32[8,1], index: 6, kind: input, shape index: {}]
  %s7 = inlined_call_operand.hbm [shape: f32[2,8,16], index: 7, kind: output, shape index: {}]
  %s8 = sld [smem:[#allocation0]]
  $region38: #{residual_block_pallas.5} parent=0
    _
  %s10 = ssub.s32 1, %s8
  %s11 = scalar_select 0, %s10, %s8
  $region1: #{residual_block_pallas.5} parent=0
    #allocation2 [shape = 'u8[8192]{0}', space=vmem, size = 0x2000, scoped, tag = 'output window, operand 0, single buffered']
    #allocation3 [shape = 's32[1]{0}', space=sflag, size = 0x4, scoped, tag = 'scoped memory for residual_block_pallas.5']
    %12 = vsyncpa [#allocation3], 0
    // Predicated region
    $region2: #{residual_block_pallas.5} parent=1 // pred_check
      _
    $region3: #{residual_block_pallas.5} parent=1 // pred_check_branch
      %14 = sbr.rel (0) target = $region5
    $region4: #{residual_block_pallas.5} parent=1 // pred_region
      _
    $region5: #{residual_block_pallas.5} parent=1 // pred_fallthru
      _
    // Predicated region
    $region6: #{residual_block_pallas.5} parent=1 // pred_check
      _
    $region7: #{residual_block_pallas.5} parent=1 // pred_check_branch
      %16 = sbr.rel (0) target = $region9
    $region8: #{residual_block_pallas.5} parent=1 // pred_region
      _
    $region9: #{residual_block_pallas.5} parent=1 // pred_fallthru
      _
    // Predicated region
    $region10: #{residual_block_pallas.5} parent=1 // pred_check
      _
    $region11: #{residual_block_pallas.5} parent=1 // pred_check_branch
      %18 = sbr.rel (0) target = $region13
    $region12: #{residual_block_pallas.5} parent=1 // pred_region
      _
    $region13: #{residual_block_pallas.5} parent=1 // pred_fallthru
      _
    // Predicated region
    $region14: #{residual_block_pallas.5} parent=1 // pred_check
      _
    $region15: #{residual_block_pallas.5} parent=1 // pred_check_branch
      %20 = sbr.rel (0) target = $region17
    $region16: #{residual_block_pallas.5} parent=1 // pred_region
      _
    $region17: #{residual_block_pallas.5} parent=1 // pred_fallthru
      _
    // Predicated region
    $region18: #{residual_block_pallas.5} parent=1 // pred_check
      _
    $region19: #{residual_block_pallas.5} parent=1 // pred_check_branch
      %22 = sbr.rel (0) target = $region21
    $region20: #{residual_block_pallas.5} parent=1 // pred_region
      _
    $region21: #{residual_block_pallas.5} parent=1 // pred_fallthru
      _
    // Predicated region
    $region22: #{residual_block_pallas.5} parent=1 // pred_check
      _
    $region23: #{residual_block_pallas.5} parent=1 // pred_check_branch
      %24 = sbr.rel (0) target = $region25
    $region24: #{residual_block_pallas.5} parent=1 // pred_region
      _
    $region25: #{residual_block_pallas.5} parent=1 // pred_fallthru
      _
    // Predicated region
    $region26: #{residual_block_pallas.5} parent=1 // pred_check
      _
    $region27: #{residual_block_pallas.5} parent=1 // pred_check_branch
      %26 = sbr.rel (0) target = $region29
    $region28: #{residual_block_pallas.5} parent=1 // pred_region
      _
    $region29: #{residual_block_pallas.5} parent=1 // pred_fallthru
      _
    %v27 = vld [vmem:[%s0] sm:$0xf]
    %v28 = vld [vmem:[%s2] sm:$0xff]
    %vm29 = vcmask 31744
    %v31 = vsel %vm29, %v28, 0
    %vm33 = vcmask 1043456
    %v35 = vsel %vm33, %v27, 0
    %37 = vmatprep.subr.mxu0 0.0
    %38 = vmatpush1.msra.mxu0 %v35
    %39 = vmatprep.subr.mxu0 0.0
    %40 = vmatpush1.msra.mxu0 0.0
    %41 = vmatprep.subr.mxu0 0.0
    %42 = vmatpush1.msra.mxu0 0.0
    %43 = vmatprep.subr.mxu0 0.0
    %44 = vmatpush1.msra.mxu0 0.0
    %45 = vmatprep.subr.mxu0 0.0
    %46 = vmatpush1.msra.mxu0 0.0
    %47 = vmatprep.subr.mxu0 0.0
    %48 = vmatpush1.msra.mxu0 0.0
    %49 = vmatprep.subr.mxu0 0.0
    %50 = vmatpush1.msra.mxu0 0.0
    %51 = vmatprep.subr.mxu0 0.0
    %52 = vmatpush1.msra.mxu0 0.0
    %53 = vmatprep.subr.mxu0 0.0
    %54 = vmatpush1.msra.mxu0 0.0
    %55 = vmatprep.subr.mxu0 0.0
    %56 = vmatpush1.msra.mxu0 0.0
    %57 = vmatprep.subr.mxu0 0.0
    %58 = vmatpush1.msra.mxu0 0.0
    %59 = vmatprep.subr.mxu0 0.0
    %60 = vmatpush1.msra.mxu0 0.0
    %61 = vmatprep.subr.mxu0 0.0
    %62 = vmatpush1.msra.mxu0 0.0
    %63 = vmatprep.subr.mxu0 0.0
    %64 = vmatpush1.msra.mxu0 0.0
    %65 = vmatprep.subr.mxu0 0.0
    %66 = vmatpush1.msra.mxu0 0.0
    %67 = vmatprep.subr.mxu0 0.0
    %68 = vmatpush1.msra.mxu0 0.0
    %69 = vmatprep.subr.mxu0 0.0
    %70 = vmatpush1.msra.mxu0 0.0
    %71 = vmatprep.subr.mxu0 0.0
    %72 = vmatpush1.msra.mxu0 0.0
    %73 = vmatprep.subr.mxu0 0.0
    %74 = vmatpush1.msra.mxu0 0.0
    %75 = vmatprep.subr.mxu0 0.0
    %76 = vmatpush1.msra.mxu0 0.0
    %77 = vmatprep.subr.mxu0 0.0
    %78 = vmatpush1.msra.mxu0 0.0
    %79 = vmatprep.subr.mxu0 0.0
    %80 = vmatpush1.msra.mxu0 0.0
    %81 = vmatprep.subr.mxu0 0.0
    %82 = vmatpush1.msra.mxu0 0.0
    %83 = vmatprep.subr.mxu0 0.0
    %84 = vmatpush1.msra.mxu0 0.0
    %85 = vmatprep.subr.mxu0 0.0
    %86 = vmatpush1.msra.mxu0 0.0
    %87 = vmatprep.subr.mxu0 0.0
    %88 = vmatpush1.msra.mxu0 0.0
    %89 = vmatprep.subr.mxu0 0.0
    %90 = vmatpush1.msra.mxu0 0.0
    %91 = vmatprep.subr.mxu0 0.0
    %92 = vmatpush1.msra.mxu0 0.0
    %93 = vmatprep.subr.mxu0 0.0
    %94 = vmatpush1.msra.mxu0 0.0
    %95 = vmatprep.subr.mxu0 0.0
    %96 = vmatpush1.msra.mxu0 0.0
    %97 = vmatprep.subr.mxu0 0.0
    %98 = vmatpush1.msra.mxu0 0.0
    %99 = vmatprep.subr.mxu0 0.0
    %100 = vmatpush1.msra.mxu0 0.0
    %101 = vmatprep.mubr.f32.mxu0 0.0
    %102 = vmatmul.mubr.f32.gmra.mrb[0].mxu0 %v31
    %v103 = vpop.f32.mrb[0].mxu0
    %v104 = vadd.f32 0.0, %v103
    %v105 = vpop.f32.mrb[0].mxu0
    %106 = vdwg.mxu0
    %v107 = vld [vmem:[%s3] sm:$0xff]
    %109 = vset.pattern.permute.xlu0 0
    %110 = vperm.xlu0 %109, %v107
    %v111 = vpop.permute.xlu0 %110
    %v113 = vmul.f32 %v104, %v111
    %v114 = vld [vmem:[%s4] sm:$0xff]
    %116 = vset.pattern.permute.xlu0 0
    %117 = vperm.xlu0 %116, %v114
    %v118 = vpop.permute.xlu0 %117
    %v120 = vadd.f32 %v113, %v118
    %v121 = vld [vmem:[%s1] sm:$0xf]
    %v122 = vunpack.c.l.bf16 %v121
    %v123 = vld [vmem:[%s5] sm:$0xff]
    %125 = vset.pattern.permute.xlu0 0
    %126 = vperm.xlu0 %125, %v123
    %v127 = vpop.permute.xlu0 %126
    %v129 = vmul.f32 %v122, %v127
    %v130 = vld [vmem:[%s6] sm:$0xff]
    %132 = vset.pattern.permute.xlu0 0
    %133 = vperm.xlu0 %132, %v130
    %v134 = vpop.permute.xlu0 %133
    %v136 = vadd.f32 %v129, %v134
    %v137 = vadd.f32 %v136, %v120
    %v138 = vmax.f32 %v137, 0.0
    %vm139 = vcmask 130048
    %140 = vst.msk [vmem:[#allocation2] sm:$0xff] %vm139, %v138
    %s141 = scalar_lea.vmem %s0, 4
    %v142 = vld [vmem:[%s141] sm:$0xf]
    %v143 = vld [vmem:[%s2] sm:$0xff]
    %v145 = vsel %vm29, %v143, 0
    %v148 = vsel %vm33, %v142, 0
    %150 = vmatprep.subr.mxu0 0.0
    %151 = vmatpush1.msra.mxu0 %v148
    %152 = vmatprep.subr.mxu0 0.0
    %153 = vmatpush1.msra.mxu0 0.0
    %154 = vmatprep.subr.mxu0 0.0
    %155 = vmatpush1.msra.mxu0 0.0
    %156 = vmatprep.subr.mxu0 0.0
    %157 = vmatpush1.msra.mxu0 0.0
    %158 = vmatprep.subr.mxu0 0.0
    %159 = vmatpush1.msra.mxu0 0.0
    %160 = vmatprep.subr.mxu0 0.0
    %161 = vmatpush1.msra.mxu0 0.0
    %162 = vmatprep.subr.mxu0 0.0
    %163 = vmatpush1.msra.mxu0 0.0
    %164 = vmatprep.subr.mxu0 0.0
    %165 = vmatpush1.msra.mxu0 0.0
    %166 = vmatprep.subr.mxu0 0.0
    %167 = vmatpush1.msra.mxu0 0.0
    %168 = vmatprep.subr.mxu0 0.0
    %169 = vmatpush1.msra.mxu0 0.0
    %170 = vmatprep.subr.mxu0 0.0
    %171 = vmatpush1.msra.mxu0 0.0
    %172 = vmatprep.subr.mxu0 0.0
    %173 = vmatpush1.msra.mxu0 0.0
    %174 = vmatprep.subr.mxu0 0.0
    %175 = vmatpush1.msra.mxu0 0.0
    %176 = vmatprep.subr.mxu0 0.0
    %177 = vmatpush1.msra.mxu0 0.0
    %178 = vmatprep.subr.mxu0 0.0
    %179 = vmatpush1.msra.mxu0 0.0
    %180 = vmatprep.subr.mxu0 0.0
    %181 = vmatpush1.msra.mxu0 0.0
    %182 = vmatprep.subr.mxu0 0.0
    %183 = vmatpush1.msra.mxu0 0.0
    %184 = vmatprep.subr.mxu0 0.0
    %185 = vmatpush1.msra.mxu0 0.0
    %186 = vmatprep.subr.mxu0 0.0
    %187 = vmatpush1.msra.mxu0 0.0
    %188 = vmatprep.subr.mxu0 0.0
    %189 = vmatpush1.msra.mxu0 0.0
    %190 = vmatprep.subr.mxu0 0.0
    %191 = vmatpush1.msra.mxu0 0.0
    %192 = vmatprep.subr.mxu0 0.0
    %193 = vmatpush1.msra.mxu0 0.0
    %194 = vmatprep.subr.mxu0 0.0
    %195 = vmatpush1.msra.mxu0 0.0
    %196 = vmatprep.subr.mxu0 0.0
    %197 = vmatpush1.msra.mxu0 0.0
    %198 = vmatprep.subr.mxu0 0.0
    %199 = vmatpush1.msra.mxu0 0.0
    %200 = vmatprep.subr.mxu0 0.0
    %201 = vmatpush1.msra.mxu0 0.0
    %202 = vmatprep.subr.mxu0 0.0
    %203 = vmatpush1.msra.mxu0 0.0
    %204 = vmatprep.subr.mxu0 0.0
    %205 = vmatpush1.msra.mxu0 0.0
    %206 = vmatprep.subr.mxu0 0.0
    %207 = vmatpush1.msra.mxu0 0.0
    %208 = vmatprep.subr.mxu0 0.0
    %209 = vmatpush1.msra.mxu0 0.0
    %210 = vmatprep.subr.mxu0 0.0
    %211 = vmatpush1.msra.mxu0 0.0
    %212 = vmatprep.subr.mxu0 0.0
    %213 = vmatpush1.msra.mxu0 0.0
    %214 = vmatprep.mubr.f32.mxu0 0.0
    %215 = vmatmul.mubr.f32.gmra.mrb[0].mxu0 %v145
    %v216 = vpop.f32.mrb[0].mxu0
    %v217 = vadd.f32 0.0, %v216
    %v218 = vpop.f32.mrb[0].mxu0
    %219 = vdwg.mxu0
    %v220 = vld [vmem:[%s3] sm:$0xff]
    %222 = vset.pattern.permute.xlu0 0
    %223 = vperm.xlu0 %222, %v220
    %v224 = vpop.permute.xlu0 %223
    %v226 = vmul.f32 %v217, %v224
    %v227 = vld [vmem:[%s4] sm:$0xff]
    %229 = vset.pattern.permute.xlu0 0
    %230 = vperm.xlu0 %229, %v227
    %v231 = vpop.permute.xlu0 %230
    %v233 = vadd.f32 %v226, %v231
    %s234 = scalar_lea.vmem %s1, 4
    %v235 = vld [vmem:[%s234] sm:$0xf]
    %v236 = vunpack.c.l.bf16 %v235
    %v237 = vld [vmem:[%s5] sm:$0xff]
    %239 = vset.pattern.permute.xlu0 0
    %240 = vperm.xlu0 %239, %v237
    %v241 = vpop.permute.xlu0 %240
    %v243 = vmul.f32 %v236, %v241
    %v244 = vld [vmem:[%s6] sm:$0xff]
    %246 = vset.pattern.permute.xlu0 0
    %247 = vperm.xlu0 %246, %v244
    %v248 = vpop.permute.xlu0 %247
    %v250 = vadd.f32 %v243, %v248
    %v251 = vadd.f32 %v250, %v233
    %v252 = vmax.f32 %v251, 0.0
    %s253 = scalar_lea.vmem [#allocation2], 8
    %254 = vst.msk [vmem:[%s253] sm:$0xff] %vm139, %v252
    // Predicated region
    $region30: #{residual_block_pallas.5} parent=1 // pred_check
      _
    $region31: #{residual_block_pallas.5} parent=1 // pred_check_branch
      %256 = sbr.rel (0) target = $region33
    $region32: #{residual_block_pallas.5} parent=1 // pred_region
      %s258 = ssub.s32 256, 256
      %259 = vsyncadd [#allocation3], %s258
      %s260 = sshll.u32 [#allocation2], 4
      %s261 = int_to_ptr.vmem [resolvable:$true] %s260
      %266 = dma.vmem_to_hbm [thread:$0]  %s261, 256, %s7, [#allocation3], 128, 128, 8
    $region33: #{residual_block_pallas.5} parent=1 // pred_fallthru
      _
    // Predicated region
    $region34: #{residual_block_pallas.5} parent=1 // pred_check
      _
    $region35: #{residual_block_pallas.5} parent=1 // pred_check_branch
      %268 = sbr.rel (0) target = $region37
    $region36: #{residual_block_pallas.5} parent=1 // pred_region
      %269 = dma.done [#allocation3], 256
    $region37: #{residual_block_pallas.5} parent=1 // pred_fallthru
      _
    %270 = vsyncpa [#allocation3], 1

// kernel: residual_block_pallas.3
$region0: #{residual_block_pallas.3}
  #allocation0 [shape = 'u32[]', space=smem, size = 0x4, offset = 0x4, fixed_abs, tag = 'smem constant byte address 0x4 - core index']
  #allocation1 [shape = 'u32[144,128]{1,0:T(1,128)}', space=vmem, size = 0x12000, scoped, tag = 'internal scratch']
  %s0 = inlined_call_operand.vmem [shape: f32[2,4,16], index: 0, kind: input, shape index: {}]
  %s1 = inlined_call_operand.vmem [shape: f32[3,8,4], index: 1, kind: input, shape index: {}]
  %s2 = inlined_call_operand.vmem [shape: f32[8,4], index: 2, kind: input, shape index: {}]
  %s3 = inlined_call_operand.vmem [shape: f32[1,8,4], index: 3, kind: output, shape index: {}]
  %s4 = sld [smem:[#allocation0]]
  $region22: #{residual_block_pallas.3} parent=0
    _
  %s6 = ssub.s32 1, %s4
  %s7 = scalar_select 0, %s6, %s4
  // Predicated region
  $region2: #{residual_block_pallas.3} parent=0 // pred_check
    _
  $region3: #{residual_block_pallas.3} parent=0 // pred_check_branch
    %9 = sbr.rel (0) target = $region5
  $region4: #{residual_block_pallas.3} parent=0 // pred_region
    _
  $region5: #{residual_block_pallas.3} parent=0 // pred_fallthru
    _
  // Predicated region
  $region6: #{residual_block_pallas.3} parent=0 // pred_check
    _
  $region7: #{residual_block_pallas.3} parent=0 // pred_check_branch
    %11 = sbr.rel (0) target = $region9
  $region8: #{residual_block_pallas.3} parent=0 // pred_region
    _
  $region9: #{residual_block_pallas.3} parent=0 // pred_fallthru
    _
  // Predicated region
  $region10: #{residual_block_pallas.3} parent=0 // pred_check
    _
  $region11: #{residual_block_pallas.3} parent=0 // pred_check_branch
    %13 = sbr.rel (0) target = $region13
  $region12: #{residual_block_pallas.3} parent=0 // pred_region
    _
  $region13: #{residual_block_pallas.3} parent=0 // pred_fallthru
    _
  %v14 = vlaneseq
  %v15 = vand.u32 %v14, 127
  %vm16 = vcmp.eq.s32.totalorder %v15, 0
  %vm17 = vcmp.eq.s32.totalorder %v15, 15
  %v18 = vld [vmem:[%s0] sm:$0xf]
  %vm19 = vcmask 1047680
  %20 = vrot.lane.b32.xlu0 %v18, 16
  %v21 = vpop.permute.xlu0 %20
  %v22 = vsel %vm19, %v21, %v18
  %23 = vrot.lane.b32.xlu0 %v22, 16
  %v24 = vpop.permute.xlu0 %23
  %v25 = vsel %vm19, %v24, %v18
  %v26 = vsel %vm16, 1, 0
  %vm27 = vcmp.eq.s32.totalorder %v26, 1
  %29 = vrot.lane.b32.xlu0 %v25, 113
  %v30 = vpop.permute.xlu0 %29
  %v32 = vsel %vm27, 0.0, %v30
  %v33 = vsel %vm17, 1, 0
  %vm34 = vcmp.eq.s32.totalorder %v33, 1
  %35 = vrot.lane.b32.xlu0 %v25, 127
  %v36 = vpop.permute.xlu0 %35
  %v38 = vsel %vm34, 0.0, %v36
  %v39 = vld [vmem:[%s1] sm:$0xff]
  %s40 = scalar_lea.vmem %s1, 8
  %v41 = vld [vmem:[%s40] sm:$0xff]
  %vm42 = vcmask 31744
  %v44 = vsel %vm42, %v41, 0
  %vm46 = vcmask 1043456
  %v48 = vsel %vm46, %v18, 0
  %50 = vmatprep.subr.mxu0 0.0
  %51 = vmatpush1.msra.mxu0 %v48
  %52 = vmatprep.subr.mxu0 0.0
  %53 = vmatpush1.msra.mxu0 0.0
  %54 = vmatprep.subr.mxu0 0.0
  %55 = vmatpush1.msra.mxu0 0.0
  %56 = vmatprep.subr.mxu0 0.0
  %57 = vmatpush1.msra.mxu0 0.0
  %58 = vmatprep.subr.mxu0 0.0
  %59 = vmatpush1.msra.mxu0 0.0
  %60 = vmatprep.subr.mxu0 0.0
  %61 = vmatpush1.msra.mxu0 0.0
  %62 = vmatprep.subr.mxu0 0.0
  %63 = vmatpush1.msra.mxu0 0.0
  %64 = vmatprep.subr.mxu0 0.0
  %65 = vmatpush1.msra.mxu0 0.0
  %66 = vmatprep.subr.mxu0 0.0
  %67 = vmatpush1.msra.mxu0 0.0
  %68 = vmatprep.subr.mxu0 0.0
  %69 = vmatpush1.msra.mxu0 0.0
  %70 = vmatprep.subr.mxu0 0.0
  %71 = vmatpush1.msra.mxu0 0.0
  %72 = vmatprep.subr.mxu0 0.0
  %73 = vmatpush1.msra.mxu0 0.0
  %74 = vmatprep.subr.mxu0 0.0
  %75 = vmatpush1.msra.mxu0 0.0
  %76 = vmatprep.subr.mxu0 0.0
  %77 = vmatpush1.msra.mxu0 0.0
  %78 = vmatprep.subr.mxu0 0.0
  %79 = vmatpush1.msra.mxu0 0.0
  %80 = vmatprep.subr.mxu0 0.0
  %81 = vmatpush1.msra.mxu0 0.0
  %82 = vmatprep.subr.mxu0 0.0
  %83 = vmatpush1.msra.mxu0 0.0
  %84 = vmatprep.subr.mxu0 0.0
  %85 = vmatpush1.msra.mxu0 0.0
  %86 = vmatprep.subr.mxu0 0.0
  %87 = vmatpush1.msra.mxu0 0.0
  %88 = vmatprep.subr.mxu0 0.0
  %89 = vmatpush1.msra.mxu0 0.0
  %90 = vmatprep.subr.mxu0 0.0
  %91 = vmatpush1.msra.mxu0 0.0
  %92 = vmatprep.subr.mxu0 0.0
  %93 = vmatpush1.msra.mxu0 0.0
  %94 = vmatprep.subr.mxu0 0.0
  %95 = vmatpush1.msra.mxu0 0.0
  %96 = vmatprep.subr.mxu0 0.0
  %97 = vmatpush1.msra.mxu0 0.0
  %98 = vmatprep.subr.mxu0 0.0
  %99 = vmatpush1.msra.mxu0 0.0
  %100 = vmatprep.subr.mxu0 0.0
  %101 = vmatpush1.msra.mxu0 0.0
  %102 = vmatprep.subr.mxu0 0.0
  %103 = vmatpush1.msra.mxu0 0.0
  %104 = vmatprep.subr.mxu0 0.0
  %105 = vmatpush1.msra.mxu0 0.0
  %106 = vmatprep.subr.mxu0 0.0
  %107 = vmatpush1.msra.mxu0 0.0
  %108 = vmatprep.subr.mxu0 0.0
  %109 = vmatpush1.msra.mxu0 0.0
  %110 = vmatprep.subr.mxu0 0.0
  %111 = vmatpush1.msra.mxu0 0.0
  %112 = vmatprep.subr.mxu0 0.0
  %113 = vmatpush1.msra.mxu0 0.0
  %114 = vmatprep.mubr.f32.mxu0 0.0
  %115 = vmatmul.mubr.f32.gmra.mrb[0].mxu0 %v44
  %v116 = vpop.f32.mrb[0].mxu0
  %v117 = vadd.f32 0.0, %v116
  %v118 = vpop.f32.mrb[0].mxu0
  %119 = vdwg.mxu0
  %v121 = vsel %vm42, %v39, 0
  %v124 = vsel %vm46, %v32, 0
  %126 = vmatprep.subr.mxu0 0.0
  %127 = vmatpush1.msra.mxu0 %v124
  %128 = vmatprep.subr.mxu0 0.0
  %129 = vmatpush1.msra.mxu0 0.0
  %130 = vmatprep.subr.mxu0 0.0
  %131 = vmatpush1.msra.mxu0 0.0
  %132 = vmatprep.subr.mxu0 0.0
  %133 = vmatpush1.msra.mxu0 0.0
  %134 = vmatprep.subr.mxu0 0.0
  %135 = vmatpush1.msra.mxu0 0.0
  %136 = vmatprep.subr.mxu0 0.0
  %137 = vmatpush1.msra.mxu0 0.0
  %138 = vmatprep.subr.mxu0 0.0
  %139 = vmatpush1.msra.mxu0 0.0
  %140 = vmatprep.subr.mxu0 0.0
  %141 = vmatpush1.msra.mxu0 0.0
  %142 = vmatprep.subr.mxu0 0.0
  %143 = vmatpush1.msra.mxu0 0.0
  %144 = vmatprep.subr.mxu0 0.0
  %145 = vmatpush1.msra.mxu0 0.0
  %146 = vmatprep.subr.mxu0 0.0
  %147 = vmatpush1.msra.mxu0 0.0
  %148 = vmatprep.subr.mxu0 0.0
  %149 = vmatpush1.msra.mxu0 0.0
  %150 = vmatprep.subr.mxu0 0.0
  %151 = vmatpush1.msra.mxu0 0.0
  %152 = vmatprep.subr.mxu0 0.0
  %153 = vmatpush1.msra.mxu0 0.0
  %154 = vmatprep.subr.mxu0 0.0
  %155 = vmatpush1.msra.mxu0 0.0
  %156 = vmatprep.subr.mxu0 0.0
  %157 = vmatpush1.msra.mxu0 0.0
  %158 = vmatprep.subr.mxu0 0.0
  %159 = vmatpush1.msra.mxu0 0.0
  %160 = vmatprep.subr.mxu0 0.0
  %161 = vmatpush1.msra.mxu0 0.0
  %162 = vmatprep.subr.mxu0 0.0
  %163 = vmatpush1.msra.mxu0 0.0
  %164 = vmatprep.subr.mxu0 0.0
  %165 = vmatpush1.msra.mxu0 0.0
  %166 = vmatprep.subr.mxu0 0.0
  %167 = vmatpush1.msra.mxu0 0.0
  %168 = vmatprep.subr.mxu0 0.0
  %169 = vmatpush1.msra.mxu0 0.0
  %170 = vmatprep.subr.mxu0 0.0
  %171 = vmatpush1.msra.mxu0 0.0
  %172 = vmatprep.subr.mxu0 0.0
  %173 = vmatpush1.msra.mxu0 0.0
  %174 = vmatprep.subr.mxu0 0.0
  %175 = vmatpush1.msra.mxu0 0.0
  %176 = vmatprep.subr.mxu0 0.0
  %177 = vmatpush1.msra.mxu0 0.0
  %178 = vmatprep.subr.mxu0 0.0
  %179 = vmatpush1.msra.mxu0 0.0
  %180 = vmatprep.subr.mxu0 0.0
  %181 = vmatpush1.msra.mxu0 0.0
  %182 = vmatprep.subr.mxu0 0.0
  %183 = vmatpush1.msra.mxu0 0.0
  %184 = vmatprep.subr.mxu0 0.0
  %185 = vmatpush1.msra.mxu0 0.0
  %186 = vmatprep.subr.mxu0 0.0
  %187 = vmatpush1.msra.mxu0 0.0
  %188 = vmatprep.subr.mxu0 0.0
  %189 = vmatpush1.msra.mxu0 0.0
  %190 = vmatprep.mubr.f32.mxu0 0.0
  %191 = vmatmul.mubr.f32.gmra.mrb[0].mxu0 %v121
  %v192 = vpop.f32.mrb[0].mxu0
  %v193 = vadd.f32 %v117, %v192
  %v194 = vpop.f32.mrb[0].mxu0
  %195 = vdwg.mxu0
  %s196 = scalar_lea.vmem %s1, 16
  %v197 = vld [vmem:[%s196] sm:$0xff]
  %v199 = vsel %vm42, %v197, 0
  %v202 = vsel %vm46, %v38, 0
  %204 = vmatprep.subr.mxu0 0.0
  %205 = vmatpush1.msra.mxu0 %v202
  %206 = vmatprep.subr.mxu0 0.0
  %207 = vmatpush1.msra.mxu0 0.0
  %208 = vmatprep.subr.mxu0 0.0
  %209 = vmatpush1.msra.mxu0 0.0
  %210 = vmatprep.subr.mxu0 0.0
  %211 = vmatpush1.msra.mxu0 0.0
  %212 = vmatprep.subr.mxu0 0.0
  %213 = vmatpush1.msra.mxu0 0.0
  %214 = vmatprep.subr.mxu0 0.0
  %215 = vmatpush1.msra.mxu0 0.0
  %216 = vmatprep.subr.mxu0 0.0
  %217 = vmatpush1.msra.mxu0 0.0
  %218 = vmatprep.subr.mxu0 0.0
  %219 = vmatpush1.msra.mxu0 0.0
  %220 = vmatprep.subr.mxu0 0.0
  %221 = vmatpush1.msra.mxu0 0.0
  %222 = vmatprep.subr.mxu0 0.0
  %223 = vmatpush1.msra.mxu0 0.0
  %224 = vmatprep.subr.mxu0 0.0
  %225 = vmatpush1.msra.mxu0 0.0
  %226 = vmatprep.subr.mxu0 0.0
  %227 = vmatpush1.msra.mxu0 0.0
  %228 = vmatprep.subr.mxu0 0.0
  %229 = vmatpush1.msra.mxu0 0.0
  %230 = vmatprep.subr.mxu0 0.0
  %231 = vmatpush1.msra.mxu0 0.0
  %232 = vmatprep.subr.mxu0 0.0
  %233 = vmatpush1.msra.mxu0 0.0
  %234 = vmatprep.subr.mxu0 0.0
  %235 = vmatpush1.msra.mxu0 0.0
  %236 = vmatprep.subr.mxu0 0.0
  %237 = vmatpush1.msra.mxu0 0.0
  %238 = vmatprep.subr.mxu0 0.0
  %239 = vmatpush1.msra.mxu0 0.0
  %240 = vmatprep.subr.mxu0 0.0
  %241 = vmatpush1.msra.mxu0 0.0
  %242 = vmatprep.subr.mxu0 0.0
  %243 = vmatpush1.msra.mxu0 0.0
  %244 = vmatprep.subr.mxu0 0.0
  %245 = vmatpush1.msra.mxu0 0.0
  %246 = vmatprep.subr.mxu0 0.0
  %247 = vmatpush1.msra.mxu0 0.0
  %248 = vmatprep.subr.mxu0 0.0
  %249 = vmatpush1.msra.mxu0 0.0
  %250 = vmatprep.subr.mxu0 0.0
  %251 = vmatpush1.msra.mxu0 0.0
  %252 = vmatprep.subr.mxu0 0.0
  %253 = vmatpush1.msra.mxu0 0.0
  %254 = vmatprep.subr.mxu0 0.0
  %255 = vmatpush1.msra.mxu0 0.0
  %256 = vmatprep.subr.mxu0 0.0
  %257 = vmatpush1.msra.mxu0 0.0
  %258 = vmatprep.subr.mxu0 0.0
  %259 = vmatpush1.msra.mxu0 0.0
  %260 = vmatprep.subr.mxu0 0.0
  %261 = vmatpush1.msra.mxu0 0.0
  %262 = vmatprep.subr.mxu0 0.0
  %263 = vmatpush1.msra.mxu0 0.0
  %264 = vmatprep.subr.mxu0 0.0
  %265 = vmatpush1.msra.mxu0 0.0
  %266 = vmatprep.subr.mxu0 0.0
  %267 = vmatpush1.msra.mxu0 0.0
  %268 = vmatprep.mubr.f32.mxu0 0.0
  %269 = vmatmul.mubr.f32.gmra.mrb[0].mxu0 %v199
  %v270 = vpop.f32.mrb[0].mxu0
  %v271 = vadd.f32 0.0, %v270
  %v272 = vpop.f32.mrb[0].mxu0
  %273 = vdwg.mxu0
  %v274 = vadd.f32 %v193, %v271
  %v275 = vld [vmem:[%s2] sm:$0xff]
  %v277 = vsel %vm42, %v275, 0
  %279 = vmatprep.subr.mxu0 0.0
  %280 = vmatpush1.msra.mxu0 %v48
  %281 = vmatprep.subr.mxu0 0.0
  %282 = vmatpush1.msra.mxu0 0.0
  %283 = vmatprep.subr.mxu0 0.0
  %284 = vmatpush1.msra.mxu0 0.0
  %285 = vmatprep.subr.mxu0 0.0
  %286 = vmatpush1.msra.mxu0 0.0
  %287 = vmatprep.subr.mxu0 0.0
  %288 = vmatpush1.msra.mxu0 0.0
  %289 = vmatprep.subr.mxu0 0.0
  %290 = vmatpush1.msra.mxu0 0.0
  %291 = vmatprep.subr.mxu0 0.0
  %292 = vmatpush1.msra.mxu0 0.0
  %293 = vmatprep.subr.mxu0 0.0
  %294 = vmatpush1.msra.mxu0 0.0
  %295 = vmatprep.subr.mxu0 0.0
  %296 = vmatpush1.msra.mxu0 0.0
  %297 = vmatprep.subr.mxu0 0.0
  %298 = vmatpush1.msra.mxu0 0.0
  %299 = vmatprep.subr.mxu0 0.0
  %300 = vmatpush1.msra.mxu0 0.0
  %301 = vmatprep.subr.mxu0 0.0
  %302 = vmatpush1.msra.mxu0 0.0
  %303 = vmatprep.subr.mxu0 0.0
  %304 = vmatpush1.msra.mxu0 0.0
  %305 = vmatprep.subr.mxu0 0.0
  %306 = vmatpush1.msra.mxu0 0.0
  %307 = vmatprep.subr.mxu0 0.0
  %308 = vmatpush1.msra.mxu0 0.0
  %309 = vmatprep.subr.mxu0 0.0
  %310 = vmatpush1.msra.mxu0 0.0
  %311 = vmatprep.subr.mxu0 0.0
  %312 = vmatpush1.msra.mxu0 0.0
  %313 = vmatprep.subr.mxu0 0.0
  %314 = vmatpush1.msra.mxu0 0.0
  %315 = vmatprep.subr.mxu0 0.0
  %316 = vmatpush1.msra.mxu0 0.0
  %317 = vmatprep.subr.mxu0 0.0
  %318 = vmatpush1.msra.mxu0 0.0
  %319 = vmatprep.subr.mxu0 0.0
  %320 = vmatpush1.msra.mxu0 0.0
  %321 = vmatprep.subr.mxu0 0.0
  %322 = vmatpush1.msra.mxu0 0.0
  %323 = vmatprep.subr.mxu0 0.0
  %324 = vmatpush1.msra.mxu0 0.0
  %325 = vmatprep.subr.mxu0 0.0
  %326 = vmatpush1.msra.mxu0 0.0
  %327 = vmatprep.subr.mxu0 0.0
  %328 = vmatpush1.msra.mxu0 0.0
  %329 = vmatprep.subr.mxu0 0.0
  %330 = vmatpush1.msra.mxu0 0.0
  %331 = vmatprep.subr.mxu0 0.0
  %332 = vmatpush1.msra.mxu0 0.0
  %333 = vmatprep.subr.mxu0 0.0
  %334 = vmatpush1.msra.mxu0 0.0
  %335 = vmatprep.subr.mxu0 0.0
  %336 = vmatpush1.msra.mxu0 0.0
  %337 = vmatprep.subr.mxu0 0.0
  %338 = vmatpush1.msra.mxu0 0.0
  %339 = vmatprep.subr.mxu0 0.0
  %340 = vmatpush1.msra.mxu0 0.0
  %341 = vmatprep.subr.mxu0 0.0
  %342 = vmatpush1.msra.mxu0 0.0
  %343 = vmatprep.mubr.f32.mxu0 0.0
  %344 = vmatmul.mubr.f32.gmra.mrb[0].mxu0 %v277
  %v345 = vpop.f32.mrb[0].mxu0
  %v346 = vadd.f32 0.0, %v345
  %v347 = vpop.f32.mrb[0].mxu0
  %348 = vdwg.mxu0
  %vm349 = vcmask 130048
  %v350 = vsel %vm349, %v274, 0.0
  %351 = vadd.xlane.f32.xlu0 %v350
  %v352 = vpop.xlane.xlu0 %351
  %v353 = vadd.f32 %v352, 0.0
  %v354 = vmul.f32 %v274, %v274
  %v355 = vsel %vm349, %v354, 0.0
  %356 = vadd.xlane.f32.xlu0 %v355
  %v357 = vpop.xlane.xlu0 %356
  %v358 = vadd.f32 %v357, 0.0
  %v359 = vsel %vm349, %v346, 0.0
  %360 = vadd.xlane.f32.xlu0 %v359
  %v361 = vpop.xlane.xlu0 %360
  %v362 = vadd.f32 %v361, 0.0
  %v363 = vmul.f32 %v346, %v346
  %v364 = vsel %vm349, %v363, 0.0
  %365 = vadd.xlane.f32.xlu0 %v364
  %v366 = vpop.xlane.xlu0 %365
  %v367 = vadd.f32 %v366, 0.0
  %s368 = scalar_lea.vmem %s0, 4
  %v369 = vld [vmem:[%s368] sm:$0xf]
  %370 = vrot.lane.b32.xlu0 %v369, 16
  %v371 = vpop.permute.xlu0 %370
  %v372 = vsel %vm19, %v371, %v369
  %373 = vrot.lane.b32.xlu0 %v372, 16
  %v374 = vpop.permute.xlu0 %373
  %v375 = vsel %vm19, %v374, %v369
  %377 = vrot.lane.b32.xlu0 %v375, 113
  %v378 = vpop.permute.xlu0 %377
  %v380 = vsel %vm27, 0.0, %v378
  %381 = vrot.lane.b32.xlu0 %v375, 127
  %v382 = vpop.permute.xlu0 %381
  %v384 = vsel %vm34, 0.0, %v382
  %v386 = vsel %vm46, %v369, 0
  %388 = vmatprep.subr.mxu0 0.0
  %389 = vmatpush1.msra.mxu0 %v386
  %390 = vmatprep.subr.mxu0 0.0
  %391 = vmatpush1.msra.mxu0 0.0
  %392 = vmatprep.subr.mxu0 0.0
  %393 = vmatpush1.msra.mxu0 0.0
  %394 = vmatprep.subr.mxu0 0.0
  %395 = vmatpush1.msra.mxu0 0.0
  %396 = vmatprep.subr.mxu0 0.0
  %397 = vmatpush1.msra.mxu0 0.0
  %398 = vmatprep.subr.mxu0 0.0
  %399 = vmatpush1.msra.mxu0 0.0
  %400 = vmatprep.subr.mxu0 0.0
  %401 = vmatpush1.msra.mxu0 0.0
  %402 = vmatprep.subr.mxu0 0.0
  %403 = vmatpush1.msra.mxu0 0.0
  %404 = vmatprep.subr.mxu0 0.0
  %405 = vmatpush1.msra.mxu0 0.0
  %406 = vmatprep.subr.mxu0 0.0
  %407 = vmatpush1.msra.mxu0 0.0
  %408 = vmatprep.subr.mxu0 0.0
  %409 = vmatpush1.msra.mxu0 0.0
  %410 = vmatprep.subr.mxu0 0.0
  %411 = vmatpush1.msra.mxu0 0.0
  %412 = vmatprep.subr.mxu0 0.0
  %413 = vmatpush1.msra.mxu0 0.0
  %414 = vmatprep.subr.mxu0 0.0
  %415 = vmatpush1.msra.mxu0 0.0
  %416 = vmatprep.subr.mxu0 0.0
  %417 = vmatpush1.msra.mxu0 0.0
  %418 = vmatprep.subr.mxu0 0.0
  %419 = vmatpush1.msra.mxu0 0.0
  %420 = vmatprep.subr.mxu0 0.0
  %421 = vmatpush1.msra.mxu0 0.0
  %422 = vmatprep.subr.mxu0 0.0
  %423 = vmatpush1.msra.mxu0 0.0
  %424 = vmatprep.subr.mxu0 0.0
  %425 = vmatpush1.msra.mxu0 0.0
  %426 = vmatprep.subr.mxu0 0.0
  %427 = vmatpush1.msra.mxu0 0.0
  %428 = vmatprep.subr.mxu0 0.0
  %429 = vmatpush1.msra.mxu0 0.0
  %430 = vmatprep.subr.mxu0 0.0
  %431 = vmatpush1.msra.mxu0 0.0
  %432 = vmatprep.subr.mxu0 0.0
  %433 = vmatpush1.msra.mxu0 0.0
  %434 = vmatprep.subr.mxu0 0.0
  %435 = vmatpush1.msra.mxu0 0.0
  %436 = vmatprep.subr.mxu0 0.0
  %437 = vmatpush1.msra.mxu0 0.0
  %438 = vmatprep.subr.mxu0 0.0
  %439 = vmatpush1.msra.mxu0 0.0
  %440 = vmatprep.subr.mxu0 0.0
  %441 = vmatpush1.msra.mxu0 0.0
  %442 = vmatprep.subr.mxu0 0.0
  %443 = vmatpush1.msra.mxu0 0.0
  %444 = vmatprep.subr.mxu0 0.0
  %445 = vmatpush1.msra.mxu0 0.0
  %446 = vmatprep.subr.mxu0 0.0
  %447 = vmatpush1.msra.mxu0 0.0
  %448 = vmatprep.subr.mxu0 0.0
  %449 = vmatpush1.msra.mxu0 0.0
  %450 = vmatprep.subr.mxu0 0.0
  %451 = vmatpush1.msra.mxu0 0.0
  %452 = vmatprep.mubr.f32.mxu0 0.0
  %453 = vmatmul.mubr.f32.gmra.mrb[0].mxu0 %v44
  %v454 = vpop.f32.mrb[0].mxu0
  %v455 = vadd.f32 0.0, %v454
  %v456 = vpop.f32.mrb[0].mxu0
  %457 = vdwg.mxu0
  %v459 = vsel %vm46, %v380, 0
  %461 = vmatprep.subr.mxu0 0.0
  %462 = vmatpush1.msra.mxu0 %v459
  %463 = vmatprep.subr.mxu0 0.0
  %464 = vmatpush1.msra.mxu0 0.0
  %465 = vmatprep.subr.mxu0 0.0
  %466 = vmatpush1.msra.mxu0 0.0
  %467 = vmatprep.subr.mxu0 0.0
  %468 = vmatpush1.msra.mxu0 0.0
  %469 = vmatprep.subr.mxu0 0.0
  %470 = vmatpush1.msra.mxu0 0.0
  %471 = vmatprep.subr.mxu0 0.0
  %472 = vmatpush1.msra.mxu0 0.0
  %473 = vmatprep.subr.mxu0 0.0
  %474 = vmatpush1.msra.mxu0 0.0
  %475 = vmatprep.subr.mxu0 0.0
  %476 = vmatpush1.msra.mxu0 0.0
  %477 = vmatprep.subr.mxu0 0.0
  %478 = vmatpush1.msra.mxu0 0.0
  %479 = vmatprep.subr.mxu0 0.0
  %480 = vmatpush1.msra.mxu0 0.0
  %481 = vmatprep.subr.mxu0 0.0
  %482 = vmatpush1.msra.mxu0 0.0
  %483 = vmatprep.subr.mxu0 0.0
  %484 = vmatpush1.msra.mxu0 0.0
  %485 = vmatprep.subr.mxu0 0.0
  %486 = vmatpush1.msra.mxu0 0.0
  %487 = vmatprep.subr.mxu0 0.0
  %488 = vmatpush1.msra.mxu0 0.0
  %489 = vmatprep.subr.mxu0 0.0
  %490 = vmatpush1.msra.mxu0 0.0
  %491 = vmatprep.subr.mxu0 0.0
  %492 = vmatpush1.msra.mxu0 0.0
  %493 = vmatprep.subr.mxu0 0.0
  %494 = vmatpush1.msra.mxu0 0.0
  %495 = vmatprep.subr.mxu0 0.0
  %496 = vmatpush1.msra.mxu0 0.0
  %497 = vmatprep.subr.mxu0 0.0
  %498 = vmatpush1.msra.mxu0 0.0
  %499 = vmatprep.subr.mxu0 0.0
  %500 = vmatpush1.msra.mxu0 0.0
  %501 = vmatprep.subr.mxu0 0.0
  %502 = vmatpush1.msra.mxu0 0.0
  %503 = vmatprep.subr.mxu0 0.0
  %504 = vmatpush1.msra.mxu0 0.0
  %505 = vmatprep.subr.mxu0 0.0
  %506 = vmatpush1.msra.mxu0 0.0
  %507 = vmatprep.subr.mxu0 0.0
  %508 = vmatpush1.msra.mxu0 0.0
  %509 = vmatprep.subr.mxu0 0.0
  %510 = vmatpush1.msra.mxu0 0.0
  %511 = vmatprep.subr.mxu0 0.0
  %512 = vmatpush1.msra.mxu0 0.0
  %513 = vmatprep.subr.mxu0 0.0
  %514 = vmatpush1.msra.mxu0 0.0
  %515 = vmatprep.subr.mxu0 0.0
  %516 = vmatpush1.msra.mxu0 0.0
  %517 = vmatprep.subr.mxu0 0.0
  %518 = vmatpush1.msra.mxu0 0.0
  %519 = vmatprep.subr.mxu0 0.0
  %520 = vmatpush1.msra.mxu0 0.0
  %521 = vmatprep.subr.mxu0 0.0
  %522 = vmatpush1.msra.mxu0 0.0
  %523 = vmatprep.subr.mxu0 0.0
  %524 = vmatpush1.msra.mxu0 0.0
  %525 = vmatprep.mubr.f32.mxu0 0.0
  %526 = vmatmul.mubr.f32.gmra.mrb[0].mxu0 %v121
  %v527 = vpop.f32.mrb[0].mxu0
  %v528 = vadd.f32 %v455, %v527
  %v529 = vpop.f32.mrb[0].mxu0
  %530 = vdwg.mxu0
  %v532 = vsel %vm46, %v384, 0
  %534 = vmatprep.subr.mxu0 0.0
  %535 = vmatpush1.msra.mxu0 %v532
  %536 = vmatprep.subr.mxu0 0.0
  %537 = vmatpush1.msra.mxu0 0.0
  %538 = vmatprep.subr.mxu0 0.0
  %539 = vmatpush1.msra.mxu0 0.0
  %540 = vmatprep.subr.mxu0 0.0
  %541 = vmatpush1.msra.mxu0 0.0
  %542 = vmatprep.subr.mxu0 0.0
  %543 = vmatpush1.msra.mxu0 0.0
  %544 = vmatprep.subr.mxu0 0.0
  %545 = vmatpush1.msra.mxu0 0.0
  %546 = vmatprep.subr.mxu0 0.0
  %547 = vmatpush1.msra.mxu0 0.0
  %548 = vmatprep.subr.mxu0 0.0
  %549 = vmatpush1.msra.mxu0 0.0
  %550 = vmatprep.subr.mxu0 0.0
  %551 = vmatpush1.msra.mxu0 0.0
  %552 = vmatprep.subr.mxu0 0.0
  %553 = vmatpush1.msra.mxu0 0.0
  %554 = vmatprep.subr.mxu0 0.0
  %555 = vmatpush1.msra.mxu0 0.0
  %556 = vmatprep.subr.mxu0 0.0
  %557 = vmatpush1.msra.mxu0 0.0
  %558 = vmatprep.subr.mxu0 0.0
  %559 = vmatpush1.msra.mxu0 0.0
  %560 = vmatprep.subr.mxu0 0.0
  %561 = vmatpush1.msra.mxu0 0.0
  %562 = vmatprep.subr.mxu0 0.0
  %563 = vmatpush1.msra.mxu0 0.0
  %564 = vmatprep.subr.mxu0 0.0
  %565 = vmatpush1.msra.mxu0 0.0
  %566 = vmatprep.subr.mxu0 0.0
  %567 = vmatpush1.msra.mxu0 0.0
  %568 = vmatprep.subr.mxu0 0.0
  %569 = vmatpush1.msra.mxu0 0.0
  %570 = vmatprep.subr.mxu0 0.0
  %571 = vmatpush1.msra.mxu0 0.0
  %572 = vmatprep.subr.mxu0 0.0
  %573 = vmatpush1.msra.mxu0 0.0
  %574 = vmatprep.subr.mxu0 0.0
  %575 = vmatpush1.msra.mxu0 0.0
  %576 = vmatprep.subr.mxu0 0.0
  %577 = vmatpush1.msra.mxu0 0.0
  %578 = vmatprep.subr.mxu0 0.0
  %579 = vmatpush1.msra.mxu0 0.0
  %580 = vmatprep.subr.mxu0 0.0
  %581 = vmatpush1.msra.mxu0 0.0
  %582 = vmatprep.subr.mxu0 0.0
  %583 = vmatpush1.msra.mxu0 0.0
  %584 = vmatprep.subr.mxu0 0.0
  %585 = vmatpush1.msra.mxu0 0.0
  %586 = vmatprep.subr.mxu0 0.0
  %587 = vmatpush1.msra.mxu0 0.0
  %588 = vmatprep.subr.mxu0 0.0
  %589 = vmatpush1.msra.mxu0 0.0
  %590 = vmatprep.subr.mxu0 0.0
  %591 = vmatpush1.msra.mxu0 0.0
  %592 = vmatprep.subr.mxu0 0.0
  %593 = vmatpush1.msra.mxu0 0.0
  %594 = vmatprep.subr.mxu0 0.0
  %595 = vmatpush1.msra.mxu0 0.0
  %596 = vmatprep.subr.mxu0 0.0
  %597 = vmatpush1.msra.mxu0 0.0
  %598 = vmatprep.mubr.f32.mxu0 0.0
  %599 = vmatmul.mubr.f32.gmra.mrb[0].mxu0 %v199
  %v600 = vpop.f32.mrb[0].mxu0
  %v601 = vadd.f32 0.0, %v600
  %v602 = vpop.f32.mrb[0].mxu0
  %603 = vdwg.mxu0
  %v604 = vadd.f32 %v528, %v601
  %605 = vmatprep.subr.mxu0 0.0
  %606 = vmatpush1.msra.mxu0 %v386
  %607 = vmatprep.subr.mxu0 0.0
  %608 = vmatpush1.msra.mxu0 0.0
  %609 = vmatprep.subr.mxu0 0.0
  %610 = vmatpush1.msra.mxu0 0.0
  %611 = vmatprep.subr.mxu0 0.0
  %612 = vmatpush1.msra.mxu0 0.0
  %613 = vmatprep.subr.mxu0 0.0
  %614 = vmatpush1.msra.mxu0 0.0
  %615 = vmatprep.subr.mxu0 0.0
  %616 = vmatpush1.msra.mxu0 0.0
  %617 = vmatprep.subr.mxu0 0.0
  %618 = vmatpush1.msra.mxu0 0.0
  %619 = vmatprep.subr.mxu0 0.0
  %620 = vmatpush1.msra.mxu0 0.0
  %621 = vmatprep.subr.mxu0 0.0
  %622 = vmatpush1.msra.mxu0 0.0
  %623 = vmatprep.subr.mxu0 0.0
  %624 = vmatpush1.msra.mxu0 0.0
  %625 = vmatprep.subr.mxu0 0.0
  %626 = vmatpush1.msra.mxu0 0.0
  %627 = vmatprep.subr.mxu0 0.0
  %628 = vmatpush1.msra.mxu0 0.0
  %629 = vmatprep.subr.mxu0 0.0
  %630 = vmatpush1.msra.mxu0 0.0
  %631 = vmatprep.subr.mxu0 0.0
  %632 = vmatpush1.msra.mxu0 0.0
  %633 = vmatprep.subr.mxu0 0.0
  %634 = vmatpush1.msra.mxu0 0.0
  %635 = vmatprep.subr.mxu0 0.0
  %636 = vmatpush1.msra.mxu0 0.0
  %637 = vmatprep.subr.mxu0 0.0
  %638 = vmatpush1.msra.mxu0 0.0
  %639 = vmatprep.subr.mxu0 0.0
  %640 = vmatpush1.msra.mxu0 0.0
  %641 = vmatprep.subr.mxu0 0.0
  %642 = vmatpush1.msra.mxu0 0.0
  %643 = vmatprep.subr.mxu0 0.0
  %644 = vmatpush1.msra.mxu0 0.0
  %645 = vmatprep.subr.mxu0 0.0
  %646 = vmatpush1.msra.mxu0 0.0
  %647 = vmatprep.subr.mxu0 0.0
  %648 = vmatpush1.msra.mxu0 0.0
  %649 = vmatprep.subr.mxu0 0.0
  %650 = vmatpush1.msra.mxu0 0.0
  %651 = vmatprep.subr.mxu0 0.0
  %652 = vmatpush1.msra.mxu0 0.0
  %653 = vmatprep.subr.mxu0 0.0
  %654 = vmatpush1.msra.mxu0 0.0
  %655 = vmatprep.subr.mxu0 0.0
  %656 = vmatpush1.msra.mxu0 0.0
  %657 = vmatprep.subr.mxu0 0.0
  %658 = vmatpush1.msra.mxu0 0.0
  %659 = vmatprep.subr.mxu0 0.0
  %660 = vmatpush1.msra.mxu0 0.0
  %661 = vmatprep.subr.mxu0 0.0
  %662 = vmatpush1.msra.mxu0 0.0
  %663 = vmatprep.subr.mxu0 0.0
  %664 = vmatpush1.msra.mxu0 0.0
  %665 = vmatprep.subr.mxu0 0.0
  %666 = vmatpush1.msra.mxu0 0.0
  %667 = vmatprep.subr.mxu0 0.0
  %668 = vmatpush1.msra.mxu0 0.0
  %669 = vmatprep.mubr.f32.mxu0 0.0
  %670 = vmatmul.mubr.f32.gmra.mrb[0].mxu0 %v277
  %v671 = vpop.f32.mrb[0].mxu0
  %v672 = vadd.f32 0.0, %v671
  %v673 = vpop.f32.mrb[0].mxu0
  %674 = vdwg.mxu0
  %v675 = vsel %vm349, %v604, 0.0
  %676 = vadd.xlane.f32.xlu0 %v675
  %v677 = vpop.xlane.xlu0 %676
  %v678 = vadd.f32 %v353, %v677
  %v679 = vmul.f32 %v604, %v604
  %v680 = vsel %vm349, %v679, 0.0
  %681 = vadd.xlane.f32.xlu0 %v680
  %v682 = vpop.xlane.xlu0 %681
  %v683 = vadd.f32 %v358, %v682
  %v684 = vsel %vm349, %v672, 0.0
  %685 = vadd.xlane.f32.xlu0 %v684
  %v686 = vpop.xlane.xlu0 %685
  %v687 = vadd.f32 %v362, %v686
  %v688 = vmul.f32 %v672, %v672
  %v689 = vsel %vm349, %v688, 0.0
  %690 = vadd.xlane.f32.xlu0 %v689
  %v691 = vpop.xlane.xlu0 %690
  %v692 = vadd.f32 %v367, %v691
  %vm693 = vcmask 7168
  %694 = vst.msk [vmem:[%s3] sm:$0xff] %vm693, %v678
  %vm695 = vcmask 15368
  %696 = vst.msk [vmem:[%s3] sm:$0xff] %vm695, %v683
  %vm697 = vcmask 23568
  %698 = vst.msk [vmem:[%s3] sm:$0xff] %vm697, %v687
  %vm699 = vcmask 31768
  %700 = vst.msk [vmem:[%s3] sm:$0xff] %vm699, %v692
  // Predicated region
  $region14: #{residual_block_pallas.3} parent=0 // pred_check
    _
  $region15: #{residual_block_pallas.3} parent=0 // pred_check_branch
    %702 = sbr.rel (0) target = $region17
  $region16: #{residual_block_pallas.3} parent=0 // pred_region
    _
  $region17: #{residual_block_pallas.3} parent=0 // pred_fallthru
    _
  // Predicated region
  $region18: #{residual_block_pallas.3} parent=0 // pred_check
    _
  $region19: #{residual_block_pallas.3} parent=0 // pred_check_branch
    %704 = sbr.rel (0) target = $region21
  $region20: #{residual_block_pallas.3} parent=0 // pred_region
    _
  $region21: #{residual_block_pallas.3} parent=0 // pred_fallthru
    _

// kernel: residual_block_pallas.4
$region0: #{residual_block_pallas.4}
  #allocation0 [shape = 'u32[]', space=smem, size = 0x4, offset = 0x4, fixed_abs, tag = 'smem constant byte address 0x4 - core index']
  #allocation1 [shape = 'u32[144,128]{1,0:T(1,128)}', space=vmem, size = 0x12000, scoped, tag = 'internal scratch']
  %s0 = inlined_call_operand.vmem [shape: f32[2,4,16], index: 0, kind: input, shape index: {}]
  %s1 = inlined_call_operand.vmem [shape: f32[3,8,4], index: 1, kind: input, shape index: {}]
  %s2 = inlined_call_operand.vmem [shape: f32[8,24], index: 2, kind: input, shape index: {}]
  %s3 = inlined_call_operand.vmem [shape: f32[8,1], index: 3, kind: input, shape index: {}]
  %s4 = inlined_call_operand.vmem [shape: f32[8,1], index: 4, kind: input, shape index: {}]
  %s5 = inlined_call_operand.vmem [shape: bf16[2,8,16], index: 5, kind: output, shape index: {0}]
  %s6 = inlined_call_operand.vmem [shape: f32[1,8,2], index: 6, kind: output, shape index: {1}]
  %7 = xla_tuple %s5, %s6
  %s8 = sld [smem:[#allocation0]]
  $region38: #{residual_block_pallas.4} parent=0
    _
  %s10 = ssub.s32 1, %s8
  %s11 = scalar_select 0, %s10, %s8
  // Predicated region
  $region2: #{residual_block_pallas.4} parent=0 // pred_check
    _
  $region3: #{residual_block_pallas.4} parent=0 // pred_check_branch
    %13 = sbr.rel (0) target = $region5
  $region4: #{residual_block_pallas.4} parent=0 // pred_region
    _
  $region5: #{residual_block_pallas.4} parent=0 // pred_fallthru
    _
  // Predicated region
  $region6: #{residual_block_pallas.4} parent=0 // pred_check
    _
  $region7: #{residual_block_pallas.4} parent=0 // pred_check_branch
    %15 = sbr.rel (0) target = $region9
  $region8: #{residual_block_pallas.4} parent=0 // pred_region
    _
  $region9: #{residual_block_pallas.4} parent=0 // pred_fallthru
    _
  // Predicated region
  $region10: #{residual_block_pallas.4} parent=0 // pred_check
    _
  $region11: #{residual_block_pallas.4} parent=0 // pred_check_branch
    %17 = sbr.rel (0) target = $region13
  $region12: #{residual_block_pallas.4} parent=0 // pred_region
    _
  $region13: #{residual_block_pallas.4} parent=0 // pred_fallthru
    _
  // Predicated region
  $region14: #{residual_block_pallas.4} parent=0 // pred_check
    _
  $region15: #{residual_block_pallas.4} parent=0 // pred_check_branch
    %19 = sbr.rel (0) target = $region17
  $region16: #{residual_block_pallas.4} parent=0 // pred_region
    _
  $region17: #{residual_block_pallas.4} parent=0 // pred_fallthru
    _
  // Predicated region
  $region18: #{residual_block_pallas.4} parent=0 // pred_check
    _
  $region19: #{residual_block_pallas.4} parent=0 // pred_check_branch
    %21 = sbr.rel (0) target = $region21
  $region20: #{residual_block_pallas.4} parent=0 // pred_region
    _
  $region21: #{residual_block_pallas.4} parent=0 // pred_fallthru
    _
  %v22 = vlaneseq
  %v23 = vand.u32 %v22, 127
  %vm24 = vcmp.eq.s32.totalorder %v23, 0
  %vm25 = vcmp.eq.s32.totalorder %v23, 15
  %v26 = vld [vmem:[%s0] sm:$0xf]
  %vm27 = vcmask 1047680
  %28 = vrot.lane.b32.xlu0 %v26, 16
  %v29 = vpop.permute.xlu0 %28
  %v30 = vsel %vm27, %v29, %v26
  %31 = vrot.lane.b32.xlu0 %v30, 16
  %v32 = vpop.permute.xlu0 %31
  %v33 = vsel %vm27, %v32, %v26
  %v34 = vsel %vm24, 1, 0
  %vm35 = vcmp.eq.s32.totalorder %v34, 1
  %37 = vrot.lane.b32.xlu0 %v33, 113
  %v38 = vpop.permute.xlu0 %37
  %v40 = vsel %vm35, 0.0, %v38
  %v41 = vsel %vm25, 1, 0
  %vm42 = vcmp.eq.s32.totalorder %v41, 1
  %43 = vrot.lane.b32.xlu0 %v33, 127
  %v44 = vpop.permute.xlu0 %43
  %v46 = vsel %vm42, 0.0, %v44
  %v47 = vld [vmem:[%s1] sm:$0xff]
  %s48 = scalar_lea.vmem %s1, 8
  %v49 = vld [vmem:[%s48] sm:$0xff]
  %vm50 = vcmask 31744
  %v52 = vsel %vm50, %v49, 0
  %vm54 = vcmask 1043456
  %v56 = vsel %vm54, %v26, 0
  %58 = vmatprep.subr.mxu0 0.0
  %59 = vmatpush1.msra.mxu0 %v56
  %60 = vmatprep.subr.mxu0 0.0
  %61 = vmatpush1.msra.mxu0 0.0
  %62 = vmatprep.subr.mxu0 0.0
  %63 = vmatpush1.msra.mxu0 0.0
  %64 = vmatprep.subr.mxu0 0.0
  %65 = vmatpush1.msra.mxu0 0.0
  %66 = vmatprep.subr.mxu0 0.0
  %67 = vmatpush1.msra.mxu0 0.0
  %68 = vmatprep.subr.mxu0 0.0
  %69 = vmatpush1.msra.mxu0 0.0
  %70 = vmatprep.subr.mxu0 0.0
  %71 = vmatpush1.msra.mxu0 0.0
  %72 = vmatprep.subr.mxu0 0.0
  %73 = vmatpush1.msra.mxu0 0.0
  %74 = vmatprep.subr.mxu0 0.0
  %75 = vmatpush1.msra.mxu0 0.0
  %76 = vmatprep.subr.mxu0 0.0
  %77 = vmatpush1.msra.mxu0 0.0
  %78 = vmatprep.subr.mxu0 0.0
  %79 = vmatpush1.msra.mxu0 0.0
  %80 = vmatprep.subr.mxu0 0.0
  %81 = vmatpush1.msra.mxu0 0.0
  %82 = vmatprep.subr.mxu0 0.0
  %83 = vmatpush1.msra.mxu0 0.0
  %84 = vmatprep.subr.mxu0 0.0
  %85 = vmatpush1.msra.mxu0 0.0
  %86 = vmatprep.subr.mxu0 0.0
  %87 = vmatpush1.msra.mxu0 0.0
  %88 = vmatprep.subr.mxu0 0.0
  %89 = vmatpush1.msra.mxu0 0.0
  %90 = vmatprep.subr.mxu0 0.0
  %91 = vmatpush1.msra.mxu0 0.0
  %92 = vmatprep.subr.mxu0 0.0
  %93 = vmatpush1.msra.mxu0 0.0
  %94 = vmatprep.subr.mxu0 0.0
  %95 = vmatpush1.msra.mxu0 0.0
  %96 = vmatprep.subr.mxu0 0.0
  %97 = vmatpush1.msra.mxu0 0.0
  %98 = vmatprep.subr.mxu0 0.0
  %99 = vmatpush1.msra.mxu0 0.0
  %100 = vmatprep.subr.mxu0 0.0
  %101 = vmatpush1.msra.mxu0 0.0
  %102 = vmatprep.subr.mxu0 0.0
  %103 = vmatpush1.msra.mxu0 0.0
  %104 = vmatprep.subr.mxu0 0.0
  %105 = vmatpush1.msra.mxu0 0.0
  %106 = vmatprep.subr.mxu0 0.0
  %107 = vmatpush1.msra.mxu0 0.0
  %108 = vmatprep.subr.mxu0 0.0
  %109 = vmatpush1.msra.mxu0 0.0
  %110 = vmatprep.subr.mxu0 0.0
  %111 = vmatpush1.msra.mxu0 0.0
  %112 = vmatprep.subr.mxu0 0.0
  %113 = vmatpush1.msra.mxu0 0.0
  %114 = vmatprep.subr.mxu0 0.0
  %115 = vmatpush1.msra.mxu0 0.0
  %116 = vmatprep.subr.mxu0 0.0
  %117 = vmatpush1.msra.mxu0 0.0
  %118 = vmatprep.subr.mxu0 0.0
  %119 = vmatpush1.msra.mxu0 0.0
  %120 = vmatprep.subr.mxu0 0.0
  %121 = vmatpush1.msra.mxu0 0.0
  %122 = vmatprep.mubr.f32.mxu0 0.0
  %123 = vmatmul.mubr.f32.gmra.mrb[0].mxu0 %v52
  %v124 = vpop.f32.mrb[0].mxu0
  %v125 = vadd.f32 0.0, %v124
  %v126 = vpop.f32.mrb[0].mxu0
  %127 = vdwg.mxu0
  %v129 = vsel %vm50, %v47, 0
  %v132 = vsel %vm54, %v40, 0
  %134 = vmatprep.subr.mxu0 0.0
  %135 = vmatpush1.msra.mxu0 %v132
  %136 = vmatprep.subr.mxu0 0.0
  %137 = vmatpush1.msra.mxu0 0.0
  %138 = vmatprep.subr.mxu0 0.0
  %139 = vmatpush1.msra.mxu0 0.0
  %140 = vmatprep.subr.mxu0 0.0
  %141 = vmatpush1.msra.mxu0 0.0
  %142 = vmatprep.subr.mxu0 0.0
  %143 = vmatpush1.msra.mxu0 0.0
  %144 = vmatprep.subr.mxu0 0.0
  %145 = vmatpush1.msra.mxu0 0.0
  %146 = vmatprep.subr.mxu0 0.0
  %147 = vmatpush1.msra.mxu0 0.0
  %148 = vmatprep.subr.mxu0 0.0
  %149 = vmatpush1.msra.mxu0 0.0
  %150 = vmatprep.subr.mxu0 0.0
  %151 = vmatpush1.msra.mxu0 0.0
  %152 = vmatprep.subr.mxu0 0.0
  %153 = vmatpush1.msra.mxu0 0.0
  %154 = vmatprep.subr.mxu0 0.0
  %155 = vmatpush1.msra.mxu0 0.0
  %156 = vmatprep.subr.mxu0 0.0
  %157 = vmatpush1.msra.mxu0 0.0
  %158 = vmatprep.subr.mxu0 0.0
  %159 = vmatpush1.msra.mxu0 0.0
  %160 = vmatprep.subr.mxu0 0.0
  %161 = vmatpush1.msra.mxu0 0.0
  %162 = vmatprep.subr.mxu0 0.0
  %163 = vmatpush1.msra.mxu0 0.0
  %164 = vmatprep.subr.mxu0 0.0
  %165 = vmatpush1.msra.mxu0 0.0
  %166 = vmatprep.subr.mxu0 0.0
  %167 = vmatpush1.msra.mxu0 0.0
  %168 = vmatprep.subr.mxu0 0.0
  %169 = vmatpush1.msra.mxu0 0.0
  %170 = vmatprep.subr.mxu0 0.0
  %171 = vmatpush1.msra.mxu0 0.0
  %172 = vmatprep.subr.mxu0 0.0
  %173 = vmatpush1.msra.mxu0 0.0
  %174 = vmatprep.subr.mxu0 0.0
  %175 = vmatpush1.msra.mxu0 0.0
  %176 = vmatprep.subr.mxu0 0.0
  %177 = vmatpush1.msra.mxu0 0.0
  %178 = vmatprep.subr.mxu0 0.0
  %179 = vmatpush1.msra.mxu0 0.0
  %180 = vmatprep.subr.mxu0 0.0
  %181 = vmatpush1.msra.mxu0 0.0
  %182 = vmatprep.subr.mxu0 0.0
  %183 = vmatpush1.msra.mxu0 0.0
  %184 = vmatprep.subr.mxu0 0.0
  %185 = vmatpush1.msra.mxu0 0.0
  %186 = vmatprep.subr.mxu0 0.0
  %187 = vmatpush1.msra.mxu0 0.0
  %188 = vmatprep.subr.mxu0 0.0
  %189 = vmatpush1.msra.mxu0 0.0
  %190 = vmatprep.subr.mxu0 0.0
  %191 = vmatpush1.msra.mxu0 0.0
  %192 = vmatprep.subr.mxu0 0.0
  %193 = vmatpush1.msra.mxu0 0.0
  %194 = vmatprep.subr.mxu0 0.0
  %195 = vmatpush1.msra.mxu0 0.0
  %196 = vmatprep.subr.mxu0 0.0
  %197 = vmatpush1.msra.mxu0 0.0
  %198 = vmatprep.mubr.f32.mxu0 0.0
  %199 = vmatmul.mubr.f32.gmra.mrb[0].mxu0 %v129
  %v200 = vpop.f32.mrb[0].mxu0
  %v201 = vadd.f32 %v125, %v200
  %v202 = vpop.f32.mrb[0].mxu0
  %203 = vdwg.mxu0
  %s204 = scalar_lea.vmem %s1, 16
  %v205 = vld [vmem:[%s204] sm:$0xff]
  %v207 = vsel %vm50, %v205, 0
  %v210 = vsel %vm54, %v46, 0
  %212 = vmatprep.subr.mxu0 0.0
  %213 = vmatpush1.msra.mxu0 %v210
  %214 = vmatprep.subr.mxu0 0.0
  %215 = vmatpush1.msra.mxu0 0.0
  %216 = vmatprep.subr.mxu0 0.0
  %217 = vmatpush1.msra.mxu0 0.0
  %218 = vmatprep.subr.mxu0 0.0
  %219 = vmatpush1.msra.mxu0 0.0
  %220 = vmatprep.subr.mxu0 0.0
  %221 = vmatpush1.msra.mxu0 0.0
  %222 = vmatprep.subr.mxu0 0.0
  %223 = vmatpush1.msra.mxu0 0.0
  %224 = vmatprep.subr.mxu0 0.0
  %225 = vmatpush1.msra.mxu0 0.0
  %226 = vmatprep.subr.mxu0 0.0
  %227 = vmatpush1.msra.mxu0 0.0
  %228 = vmatprep.subr.mxu0 0.0
  %229 = vmatpush1.msra.mxu0 0.0
  %230 = vmatprep.subr.mxu0 0.0
  %231 = vmatpush1.msra.mxu0 0.0
  %232 = vmatprep.subr.mxu0 0.0
  %233 = vmatpush1.msra.mxu0 0.0
  %234 = vmatprep.subr.mxu0 0.0
  %235 = vmatpush1.msra.mxu0 0.0
  %236 = vmatprep.subr.mxu0 0.0
  %237 = vmatpush1.msra.mxu0 0.0
  %238 = vmatprep.subr.mxu0 0.0
  %239 = vmatpush1.msra.mxu0 0.0
  %240 = vmatprep.subr.mxu0 0.0
  %241 = vmatpush1.msra.mxu0 0.0
  %242 = vmatprep.subr.mxu0 0.0
  %243 = vmatpush1.msra.mxu0 0.0
  %244 = vmatprep.subr.mxu0 0.0
  %245 = vmatpush1.msra.mxu0 0.0
  %246 = vmatprep.subr.mxu0 0.0
  %247 = vmatpush1.msra.mxu0 0.0
  %248 = vmatprep.subr.mxu0 0.0
  %249 = vmatpush1.msra.mxu0 0.0
  %250 = vmatprep.subr.mxu0 0.0
  %251 = vmatpush1.msra.mxu0 0.0
  %252 = vmatprep.subr.mxu0 0.0
  %253 = vmatpush1.msra.mxu0 0.0
  %254 = vmatprep.subr.mxu0 0.0
  %255 = vmatpush1.msra.mxu0 0.0
  %256 = vmatprep.subr.mxu0 0.0
  %257 = vmatpush1.msra.mxu0 0.0
  %258 = vmatprep.subr.mxu0 0.0
  %259 = vmatpush1.msra.mxu0 0.0
  %260 = vmatprep.subr.mxu0 0.0
  %261 = vmatpush1.msra.mxu0 0.0
  %262 = vmatprep.subr.mxu0 0.0
  %263 = vmatpush1.msra.mxu0 0.0
  %264 = vmatprep.subr.mxu0 0.0
  %265 = vmatpush1.msra.mxu0 0.0
  %266 = vmatprep.subr.mxu0 0.0
  %267 = vmatpush1.msra.mxu0 0.0
  %268 = vmatprep.subr.mxu0 0.0
  %269 = vmatpush1.msra.mxu0 0.0
  %270 = vmatprep.subr.mxu0 0.0
  %271 = vmatpush1.msra.mxu0 0.0
  %272 = vmatprep.subr.mxu0 0.0
  %273 = vmatpush1.msra.mxu0 0.0
  %274 = vmatprep.subr.mxu0 0.0
  %275 = vmatpush1.msra.mxu0 0.0
  %276 = vmatprep.mubr.f32.mxu0 0.0
  %277 = vmatmul.mubr.f32.gmra.mrb[0].mxu0 %v207
  %v278 = vpop.f32.mrb[0].mxu0
  %v279 = vadd.f32 0.0, %v278
  %v280 = vpop.f32.mrb[0].mxu0
  %281 = vdwg.mxu0
  %v282 = vadd.f32 %v201, %v279
  %v283 = vld [vmem:[%s3] sm:$0xff]
  %285 = vset.pattern.permute.xlu0 0
  %286 = vperm.xlu0 %285, %v283
  %v287 = vpop.permute.xlu0 %286
  %v289 = vmul.f32 %v282, %v287
  %v290 = vld [vmem:[%s4] sm:$0xff]
  %292 = vset.pattern.permute.xlu0 0
  %293 = vperm.xlu0 %292, %v290
  %v294 = vpop.permute.xlu0 %293
  %v296 = vadd.f32 %v289, %v294
  %v297 = vmax.f32 %v296, 0.0
  %298 = vrot.lane.b32.xlu0 %v297, 16
  %v299 = vpop.permute.xlu0 %298
  %v300 = vsel %vm27, %v299, %v297
  %301 = vrot.lane.b32.xlu0 %v300, 16
  %v302 = vpop.permute.xlu0 %301
  %v303 = vsel %vm27, %v302, %v297
  %305 = vrot.lane.b32.xlu0 %v303, 113
  %v306 = vpop.permute.xlu0 %305
  %v308 = vsel %vm35, 0.0, %v306
  %309 = vrot.lane.b32.xlu0 %v303, 127
  %v310 = vpop.permute.xlu0 %309
  %v312 = vsel %vm42, 0.0, %v310
  %v313 = vld [vmem:[%s2] sm:$0xff]
  %vm314 = vcmask 195584
  %v316 = vsel %vm314, %v313, 0
  %318 = vmatprep.subr.mxu0 0.0
  %319 = vmatpush1.msra.mxu0 %v308
  %320 = vmatprep.subr.mxu0 0.0
  %321 = vmatpush1.msra.mxu0 %v297
  %322 = vmatprep.subr.mxu0 0.0
  %323 = vmatpush1.msra.mxu0 %v312
  %324 = vmatprep.subr.mxu0 0.0
  %325 = vmatpush1.msra.mxu0 0.0
  %326 = vmatprep.subr.mxu0 0.0
  %327 = vmatpush1.msra.mxu0 0.0
  %328 = vmatprep.subr.mxu0 0.0
  %329 = vmatpush1.msra.mxu0 0.0
  %330 = vmatprep.subr.mxu0 0.0
  %331 = vmatpush1.msra.mxu0 0.0
  %332 = vmatprep.subr.mxu0 0.0
  %333 = vmatpush1.msra.mxu0 0.0
  %334 = vmatprep.subr.mxu0 0.0
  %335 = vmatpush1.msra.mxu0 0.0
  %336 = vmatprep.subr.mxu0 0.0
  %337 = vmatpush1.msra.mxu0 0.0
  %338 = vmatprep.subr.mxu0 0.0
  %339 = vmatpush1.msra.mxu0 0.0
  %340 = vmatprep.subr.mxu0 0.0
  %341 = vmatpush1.msra.mxu0 0.0
  %342 = vmatprep.subr.mxu0 0.0
  %343 = vmatpush1.msra.mxu0 0.0
  %344 = vmatprep.subr.mxu0 0.0
  %345 = vmatpush1.msra.mxu0 0.0
  %346 = vmatprep.subr.mxu0 0.0
  %347 = vmatpush1.msra.mxu0 0.0
  %348 = vmatprep.subr.mxu0 0.0
  %349 = vmatpush1.msra.mxu0 0.0
  %350 = vmatprep.subr.mxu0 0.0
  %351 = vmatpush1.msra.mxu0 0.0
  %352 = vmatprep.subr.mxu0 0.0
  %353 = vmatpush1.msra.mxu0 0.0
  %354 = vmatprep.subr.mxu0 0.0
  %355 = vmatpush1.msra.mxu0 0.0
  %356 = vmatprep.subr.mxu0 0.0
  %357 = vmatpush1.msra.mxu0 0.0
  %358 = vmatprep.subr.mxu0 0.0
  %359 = vmatpush1.msra.mxu0 0.0
  %360 = vmatprep.subr.mxu0 0.0
  %361 = vmatpush1.msra.mxu0 0.0
  %362 = vmatprep.subr.mxu0 0.0
  %363 = vmatpush1.msra.mxu0 0.0
  %364 = vmatprep.subr.mxu0 0.0
  %365 = vmatpush1.msra.mxu0 0.0
  %366 = vmatprep.subr.mxu0 0.0
  %367 = vmatpush1.msra.mxu0 0.0
  %368 = vmatprep.subr.mxu0 0.0
  %369 = vmatpush1.msra.mxu0 0.0
  %370 = vmatprep.subr.mxu0 0.0
  %371 = vmatpush1.msra.mxu0 0.0
  %372 = vmatprep.subr.mxu0 0.0
  %373 = vmatpush1.msra.mxu0 0.0
  %374 = vmatprep.subr.mxu0 0.0
  %375 = vmatpush1.msra.mxu0 0.0
  %376 = vmatprep.subr.mxu0 0.0
  %377 = vmatpush1.msra.mxu0 0.0
  %378 = vmatprep.subr.mxu0 0.0
  %379 = vmatpush1.msra.mxu0 0.0
  %380 = vmatprep.subr.mxu0 0.0
  %381 = vmatpush1.msra.mxu0 0.0
  %382 = vmatprep.mubr.f32.mxu0 0.0
  %383 = vmatmul.mubr.f32.gmra.mrb[0].mxu0 %v316
  %v384 = vpop.f32.mrb[0].mxu0
  %v385 = vadd.f32 0.0, %v384
  %v386 = vpop.f32.mrb[0].mxu0
  %387 = vdwg.mxu0
  %v388 = vpack.c.bf16 %v385, %v385
  %vm389 = vcmask 125952
  %390 = vst.msk [vmem:[%s5] sm:$0xf] %vm389, %v388
  %vm391 = vcmask 130048
  %v392 = vsel %vm391, %v385, 0.0
  %393 = vadd.xlane.f32.xlu0 %v392
  %v394 = vpop.xlane.xlu0 %393
  %v395 = vadd.f32 %v394, 0.0
  %v396 = vmul.f32 %v385, %v385
  %v397 = vsel %vm391, %v396, 0.0
  %398 = vadd.xlane.f32.xlu0 %v397
  %v399 = vpop.xlane.xlu0 %398
  %v400 = vadd.f32 %v399, 0.0
  %s401 = scalar_lea.vmem %s0, 4
  %v402 = vld [vmem:[%s401] sm:$0xf]
  %403 = vrot.lane.b32.xlu0 %v402, 16
  %v404 = vpop.permute.xlu0 %403
  %v405 = vsel %vm27, %v404, %v402
  %406 = vrot.lane.b32.xlu0 %v405, 16
  %v407 = vpop.permute.xlu0 %406
  %v408 = vsel %vm27, %v407, %v402
  %410 = vrot.lane.b32.xlu0 %v408, 113
  %v411 = vpop.permute.xlu0 %410
  %v413 = vsel %vm35, 0.0, %v411
  %414 = vrot.lane.b32.xlu0 %v408, 127
  %v415 = vpop.permute.xlu0 %414
  %v417 = vsel %vm42, 0.0, %v415
  %v418 = vld [vmem:[%s1] sm:$0xff]
  %v419 = vld [vmem:[%s48] sm:$0xff]
  %v421 = vsel %vm50, %v419, 0
  %v424 = vsel %vm54, %v402, 0
  %426 = vmatprep.subr.mxu0 0.0
  %427 = vmatpush1.msra.mxu0 %v424
  %428 = vmatprep.subr.mxu0 0.0
  %429 = vmatpush1.msra.mxu0 0.0
  %430 = vmatprep.subr.mxu0 0.0
  %431 = vmatpush1.msra.mxu0 0.0
  %432 = vmatprep.subr.mxu0 0.0
  %433 = vmatpush1.msra.mxu0 0.0
  %434 = vmatprep.subr.mxu0 0.0
  %435 = vmatpush1.msra.mxu0 0.0
  %436 = vmatprep.subr.mxu0 0.0
  %437 = vmatpush1.msra.mxu0 0.0
  %438 = vmatprep.subr.mxu0 0.0
  %439 = vmatpush1.msra.mxu0 0.0
  %440 = vmatprep.subr.mxu0 0.0
  %441 = vmatpush1.msra.mxu0 0.0
  %442 = vmatprep.subr.mxu0 0.0
  %443 = vmatpush1.msra.mxu0 0.0
  %444 = vmatprep.subr.mxu0 0.0
  %445 = vmatpush1.msra.mxu0 0.0
  %446 = vmatprep.subr.mxu0 0.0
  %447 = vmatpush1.msra.mxu0 0.0
  %448 = vmatprep.subr.mxu0 0.0
  %449 = vmatpush1.msra.mxu0 0.0
  %450 = vmatprep.subr.mxu0 0.0
  %451 = vmatpush1.msra.mxu0 0.0
  %452 = vmatprep.subr.mxu0 0.0
  %453 = vmatpush1.msra.mxu0 0.0
  %454 = vmatprep.subr.mxu0 0.0
  %455 = vmatpush1.msra.mxu0 0.0
  %456 = vmatprep.subr.mxu0 0.0
  %457 = vmatpush1.msra.mxu0 0.0
  %458 = vmatprep.subr.mxu0 0.0
  %459 = vmatpush1.msra.mxu0 0.0
  %460 = vmatprep.subr.mxu0 0.0
  %461 = vmatpush1.msra.mxu0 0.0
  %462 = vmatprep.subr.mxu0 0.0
  %463 = vmatpush1.msra.mxu0 0.0
  %464 = vmatprep.subr.mxu0 0.0
  %465 = vmatpush1.msra.mxu0 0.0
  %466 = vmatprep.subr.mxu0 0.0
  %467 = vmatpush1.msra.mxu0 0.0
  %468 = vmatprep.subr.mxu0 0.0
  %469 = vmatpush1.msra.mxu0 0.0
  %470 = vmatprep.subr.mxu0 0.0
  %471 = vmatpush1.msra.mxu0 0.0
  %472 = vmatprep.subr.mxu0 0.0
  %473 = vmatpush1.msra.mxu0 0.0
  %474 = vmatprep.subr.mxu0 0.0
  %475 = vmatpush1.msra.mxu0 0.0
  %476 = vmatprep.subr.mxu0 0.0
  %477 = vmatpush1.msra.mxu0 0.0
  %478 = vmatprep.subr.mxu0 0.0
  %479 = vmatpush1.msra.mxu0 0.0
  %480 = vmatprep.subr.mxu0 0.0
  %481 = vmatpush1.msra.mxu0 0.0
  %482 = vmatprep.subr.mxu0 0.0
  %483 = vmatpush1.msra.mxu0 0.0
  %484 = vmatprep.subr.mxu0 0.0
  %485 = vmatpush1.msra.mxu0 0.0
  %486 = vmatprep.subr.mxu0 0.0
  %487 = vmatpush1.msra.mxu0 0.0
  %488 = vmatprep.subr.mxu0 0.0
  %489 = vmatpush1.msra.mxu0 0.0
  %490 = vmatprep.mubr.f32.mxu0 0.0
  %491 = vmatmul.mubr.f32.gmra.mrb[0].mxu0 %v421
  %v492 = vpop.f32.mrb[0].mxu0
  %v493 = vadd.f32 0.0, %v492
  %v494 = vpop.f32.mrb[0].mxu0
  %495 = vdwg.mxu0
  %v497 = vsel %vm50, %v418, 0
  %v500 = vsel %vm54, %v413, 0
  %502 = vmatprep.subr.mxu0 0.0
  %503 = vmatpush1.msra.mxu0 %v500
  %504 = vmatprep.subr.mxu0 0.0
  %505 = vmatpush1.msra.mxu0 0.0
  %506 = vmatprep.subr.mxu0 0.0
  %507 = vmatpush1.msra.mxu0 0.0
  %508 = vmatprep.subr.mxu0 0.0
  %509 = vmatpush1.msra.mxu0 0.0
  %510 = vmatprep.subr.mxu0 0.0
  %511 = vmatpush1.msra.mxu0 0.0
  %512 = vmatprep.subr.mxu0 0.0
  %513 = vmatpush1.msra.mxu0 0.0
  %514 = vmatprep.subr.mxu0 0.0
  %515 = vmatpush1.msra.mxu0 0.0
  %516 = vmatprep.subr.mxu0 0.0
  %517 = vmatpush1.msra.mxu0 0.0
  %518 = vmatprep.subr.mxu0 0.0
  %519 = vmatpush1.msra.mxu0 0.0
  %520 = vmatprep.subr.mxu0 0.0
  %521 = vmatpush1.msra.mxu0 0.0
  %522 = vmatprep.subr.mxu0 0.0
  %523 = vmatpush1.msra.mxu0 0.0
  %524 = vmatprep.subr.mxu0 0.0
  %525 = vmatpush1.msra.mxu0 0.0
  %526 = vmatprep.subr.mxu0 0.0
  %527 = vmatpush1.msra.mxu0 0.0
  %528 = vmatprep.subr.mxu0 0.0
  %529 = vmatpush1.msra.mxu0 0.0
  %530 = vmatprep.subr.mxu0 0.0
  %531 = vmatpush1.msra.mxu0 0.0
  %532 = vmatprep.subr.mxu0 0.0
  %533 = vmatpush1.msra.mxu0 0.0
  %534 = vmatprep.subr.mxu0 0.0
  %535 = vmatpush1.msra.mxu0 0.0
  %536 = vmatprep.subr.mxu0 0.0
  %537 = vmatpush1.msra.mxu0 0.0
  %538 = vmatprep.subr.mxu0 0.0
  %539 = vmatpush1.msra.mxu0 0.0
  %540 = vmatprep.subr.mxu0 0.0
  %541 = vmatpush1.msra.mxu0 0.0
  %542 = vmatprep.subr.mxu0 0.0
  %543 = vmatpush1.msra.mxu0 0.0
  %544 = vmatprep.subr.mxu0 0.0
  %545 = vmatpush1.msra.mxu0 0.0
  %546 = vmatprep.subr.mxu0 0.0
  %547 = vmatpush1.msra.mxu0 0.0
  %548 = vmatprep.subr.mxu0 0.0
  %549 = vmatpush1.msra.mxu0 0.0
  %550 = vmatprep.subr.mxu0 0.0
  %551 = vmatpush1.msra.mxu0 0.0
  %552 = vmatprep.subr.mxu0 0.0
  %553 = vmatpush1.msra.mxu0 0.0
  %554 = vmatprep.subr.mxu0 0.0
  %555 = vmatpush1.msra.mxu0 0.0
  %556 = vmatprep.subr.mxu0 0.0
  %557 = vmatpush1.msra.mxu0 0.0
  %558 = vmatprep.subr.mxu0 0.0
  %559 = vmatpush1.msra.mxu0 0.0
  %560 = vmatprep.subr.mxu0 0.0
  %561 = vmatpush1.msra.mxu0 0.0
  %562 = vmatprep.subr.mxu0 0.0
  %563 = vmatpush1.msra.mxu0 0.0
  %564 = vmatprep.subr.mxu0 0.0
  %565 = vmatpush1.msra.mxu0 0.0
  %566 = vmatprep.mubr.f32.mxu0 0.0
  %567 = vmatmul.mubr.f32.gmra.mrb[0].mxu0 %v497
  %v568 = vpop.f32.mrb[0].mxu0
  %v569 = vadd.f32 %v493, %v568
  %v570 = vpop.f32.mrb[0].mxu0
  %571 = vdwg.mxu0
  %v572 = vld [vmem:[%s204] sm:$0xff]
  %v574 = vsel %vm50, %v572, 0
  %v577 = vsel %vm54, %v417, 0
  %579 = vmatprep.subr.mxu0 0.0
  %580 = vmatpush1.msra.mxu0 %v577
  %581 = vmatprep.subr.mxu0 0.0
  %582 = vmatpush1.msra.mxu0 0.0
  %583 = vmatprep.subr.mxu0 0.0
  %584 = vmatpush1.msra.mxu0 0.0
  %585 = vmatprep.subr.mxu0 0.0
  %586 = vmatpush1.msra.mxu0 0.0
  %587 = vmatprep.subr.mxu0 0.0
  %588 = vmatpush1.msra.mxu0 0.0
  %589 = vmatprep.subr.mxu0 0.0
  %590 = vmatpush1.msra.mxu0 0.0
  %591 = vmatprep.subr.mxu0 0.0
  %592 = vmatpush1.msra.mxu0 0.0
  %593 = vmatprep.subr.mxu0 0.0
  %594 = vmatpush1.msra.mxu0 0.0
  %595 = vmatprep.subr.mxu0 0.0
  %596 = vmatpush1.msra.mxu0 0.0
  %597 = vmatprep.subr.mxu0 0.0
  %598 = vmatpush1.msra.mxu0 0.0
  %599 = vmatprep.subr.mxu0 0.0
  %600 = vmatpush1.msra.mxu0 0.0
  %601 = vmatprep.subr.mxu0 0.0
  %602 = vmatpush1.msra.mxu0 0.0
  %603 = vmatprep.subr.mxu0 0.0
  %604 = vmatpush1.msra.mxu0 0.0
  %605 = vmatprep.subr.mxu0 0.0
  %606 = vmatpush1.msra.mxu0 0.0
  %607 = vmatprep.subr.mxu0 0.0
  %608 = vmatpush1.msra.mxu0 0.0
  %609 = vmatprep.subr.mxu0 0.0
  %610 = vmatpush1.msra.mxu0 0.0
  %611 = vmatprep.subr.mxu0 0.0
  %612 = vmatpush1.msra.mxu0 0.0
  %613 = vmatprep.subr.mxu0 0.0
  %614 = vmatpush1.msra.mxu0 0.0
  %615 = vmatprep.subr.mxu0 0.0
  %616 = vmatpush1.msra.mxu0 0.0
  %617 = vmatprep.subr.mxu0 0.0
  %618 = vmatpush1.msra.mxu0 0.0
  %619 = vmatprep.subr.mxu0 0.0
  %620 = vmatpush1.msra.mxu0 0.0
  %621 = vmatprep.subr.mxu0 0.0
  %622 = vmatpush1.msra.mxu0 0.0
  %623 = vmatprep.subr.mxu0 0.0
  %624 = vmatpush1.msra.mxu0 0.0
  %625 = vmatprep.subr.mxu0 0.0
  %626 = vmatpush1.msra.mxu0 0.0
  %627 = vmatprep.subr.mxu0 0.0
  %628 = vmatpush1.msra.mxu0 0.0
  %629 = vmatprep.subr.mxu0 0.0
  %630 = vmatpush1.msra.mxu0 0.0
  %631 = vmatprep.subr.mxu0 0.0
  %632 = vmatpush1.msra.mxu0 0.0
  %633 = vmatprep.subr.mxu0 0.0
  %634 = vmatpush1.msra.mxu0 0.0
  %635 = vmatprep.subr.mxu0 0.0
  %636 = vmatpush1.msra.mxu0 0.0
  %637 = vmatprep.subr.mxu0 0.0
  %638 = vmatpush1.msra.mxu0 0.0
  %639 = vmatprep.subr.mxu0 0.0
  %640 = vmatpush1.msra.mxu0 0.0
  %641 = vmatprep.subr.mxu0 0.0
  %642 = vmatpush1.msra.mxu0 0.0
  %643 = vmatprep.mubr.f32.mxu0 0.0
  %644 = vmatmul.mubr.f32.gmra.mrb[0].mxu0 %v574
  %v645 = vpop.f32.mrb[0].mxu0
  %v646 = vadd.f32 0.0, %v645
  %v647 = vpop.f32.mrb[0].mxu0
  %648 = vdwg.mxu0
  %v649 = vadd.f32 %v569, %v646
  %v650 = vld [vmem:[%s3] sm:$0xff]
  %652 = vset.pattern.permute.xlu0 0
  %653 = vperm.xlu0 %652, %v650
  %v654 = vpop.permute.xlu0 %653
  %v656 = vmul.f32 %v649, %v654
  %v657 = vld [vmem:[%s4] sm:$0xff]
  %659 = vset.pattern.permute.xlu0 0
  %660 = vperm.xlu0 %659, %v657
  %v661 = vpop.permute.xlu0 %660
  %v663 = vadd.f32 %v656, %v661
  %v664 = vmax.f32 %v663, 0.0
  %665 = vrot.lane.b32.xlu0 %v664, 16
  %v666 = vpop.permute.xlu0 %665
  %v667 = vsel %vm27, %v666, %v664
  %668 = vrot.lane.b32.xlu0 %v667, 16
  %v669 = vpop.permute.xlu0 %668
  %v670 = vsel %vm27, %v669, %v664
  %672 = vrot.lane.b32.xlu0 %v670, 113
  %v673 = vpop.permute.xlu0 %672
  %v675 = vsel %vm35, 0.0, %v673
  %676 = vrot.lane.b32.xlu0 %v670, 127
  %v677 = vpop.permute.xlu0 %676
  %v679 = vsel %vm42, 0.0, %v677
  %v680 = vld [vmem:[%s2] sm:$0xff]
  %v682 = vsel %vm314, %v680, 0
  %684 = vmatprep.subr.mxu0 0.0
  %685 = vmatpush1.msra.mxu0 %v675
  %686 = vmatprep.subr.mxu0 0.0
  %687 = vmatpush1.msra.mxu0 %v664
  %688 = vmatprep.subr.mxu0 0.0
  %689 = vmatpush1.msra.mxu0 %v679
  %690 = vmatprep.subr.mxu0 0.0
  %691 = vmatpush1.msra.mxu0 0.0
  %692 = vmatprep.subr.mxu0 0.0
  %693 = vmatpush1.msra.mxu0 0.0
  %694 = vmatprep.subr.mxu0 0.0
  %695 = vmatpush1.msra.mxu0 0.0
  %696 = vmatprep.subr.mxu0 0.0
  %697 = vmatpush1.msra.mxu0 0.0
  %698 = vmatprep.subr.mxu0 0.0
  %699 = vmatpush1.msra.mxu0 0.0
  %700 = vmatprep.subr.mxu0 0.0
  %701 = vmatpush1.msra.mxu0 0.0
  %702 = vmatprep.subr.mxu0 0.0
  %703 = vmatpush1.msra.mxu0 0.0
  %704 = vmatprep.subr.mxu0 0.0
  %705 = vmatpush1.msra.mxu0 0.0
  %706 = vmatprep.subr.mxu0 0.0
  %707 = vmatpush1.msra.mxu0 0.0
  %708 = vmatprep.subr.mxu0 0.0
  %709 = vmatpush1.msra.mxu0 0.0
  %710 = vmatprep.subr.mxu0 0.0
  %711 = vmatpush1.msra.mxu0 0.0
  %712 = vmatprep.subr.mxu0 0.0
  %713 = vmatpush1.msra.mxu0 0.0
  %714 = vmatprep.subr.mxu0 0.0
  %715 = vmatpush1.msra.mxu0 0.0
  %716 = vmatprep.subr.mxu0 0.0
  %717 = vmatpush1.msra.mxu0 0.0
  %718 = vmatprep.subr.mxu0 0.0
  %719 = vmatpush1.msra.mxu0 0.0
  %720 = vmatprep.subr.mxu0 0.0
  %721 = vmatpush1.msra.mxu0 0.0
  %722 = vmatprep.subr.mxu0 0.0
  %723 = vmatpush1.msra.mxu0 0.0
  %724 = vmatprep.subr.mxu0 0.0
  %725 = vmatpush1.msra.mxu0 0.0
  %726 = vmatprep.subr.mxu0 0.0
  %727 = vmatpush1.msra.mxu0 0.0
  %728 = vmatprep.subr.mxu0 0.0
  %729 = vmatpush1.msra.mxu0 0.0
  %730 = vmatprep.subr.mxu0 0.0
  %731 = vmatpush1.msra.mxu0 0.0
  %732 = vmatprep.subr.mxu0 0.0
  %733 = vmatpush1.msra.mxu0 0.0
  %734 = vmatprep.subr.mxu0 0.0
  %735 = vmatpush1.msra.mxu0 0.0
  %736 = vmatprep.subr.mxu0 0.0
  %737 = vmatpush1.msra.mxu0 0.0
  %738 = vmatprep.subr.mxu0 0.0
  %739 = vmatpush1.msra.mxu0 0.0
  %740 = vmatprep.subr.mxu0 0.0
  %741 = vmatpush1.msra.mxu0 0.0
  %742 = vmatprep.subr.mxu0 0.0
  %743 = vmatpush1.msra.mxu0 0.0
  %744 = vmatprep.subr.mxu0 0.0
  %745 = vmatpush1.msra.mxu0 0.0
  %746 = vmatprep.subr.mxu0 0.0
  %747 = vmatpush1.msra.mxu0 0.0
  %748 = vmatprep.mubr.f32.mxu0 0.0
  %749 = vmatmul.mubr.f32.gmra.mrb[0].mxu0 %v682
  %v750 = vpop.f32.mrb[0].mxu0
  %v751 = vadd.f32 0.0, %v750
  %v752 = vpop.f32.mrb[0].mxu0
  %753 = vdwg.mxu0
  %v754 = vpack.c.bf16 %v751, %v751
  %s755 = scalar_lea.vmem %s5, 4
  %756 = vst.msk [vmem:[%s755] sm:$0xf] %vm389, %v754
  %v757 = vsel %vm391, %v751, 0.0
  %758 = vadd.xlane.f32.xlu0 %v757
  %v759 = vpop.xlane.xlu0 %758
  %v760 = vadd.f32 %v395, %v759
  %v761 = vmul.f32 %v751, %v751
  %v762 = vsel %vm391, %v761, 0.0
  %763 = vadd.xlane.f32.xlu0 %v762
  %v764 = vpop.xlane.xlu0 %763
  %v765 = vadd.f32 %v400, %v764
  %vm766 = vcmask 7168
  %767 = vst.msk [vmem:[%s6] sm:$0xff] %vm766, %v760
  %vm768 = vcmask 15368
  %769 = vst.msk [vmem:[%s6] sm:$0xff] %vm768, %v765
  // Predicated region
  $region22: #{residual_block_pallas.4} parent=0 // pred_check
    _
  $region23: #{residual_block_pallas.4} parent=0 // pred_check_branch
    %771 = sbr.rel (0) target = $region25
  $region24: #{residual_block_pallas.4} parent=0 // pred_region
    _
  $region25: #{residual_block_pallas.4} parent=0 // pred_fallthru
    _
  // Predicated region
  $region26: #{residual_block_pallas.4} parent=0 // pred_check
    _
  $region27: #{residual_block_pallas.4} parent=0 // pred_check_branch
    %773 = sbr.rel (0) target = $region29
  $region28: #{residual_block_pallas.4} parent=0 // pred_region
    _
  $region29: #{residual_block_pallas.4} parent=0 // pred_fallthru
    _
  // Predicated region
  $region30: #{residual_block_pallas.4} parent=0 // pred_check
    _
  $region31: #{residual_block_pallas.4} parent=0 // pred_check_branch
    %775 = sbr.rel (0) target = $region33
  $region32: #{residual_block_pallas.4} parent=0 // pred_region
    _
  $region33: #{residual_block_pallas.4} parent=0 // pred_fallthru
    _
  // Predicated region
  $region34: #{residual_block_pallas.4} parent=0 // pred_check
    _
  $region35: #{residual_block_pallas.4} parent=0 // pred_check_branch
    %777 = sbr.rel (0) target = $region37
  $region36: #{residual_block_pallas.4} parent=0 // pred_region
    _
  $region37: #{residual_block_pallas.4} parent=0 // pred_fallthru
    _

</llo_original>
